<compile_context>
chip_gen: v7x
topology: tpu7x:2x2x1
jax: 0.10.0
libtpu: 0.0.40
codegen_flags: <defaults>
</compile_context>

<pallas_src>
import functools

import jax
import jax.numpy as jnp
from jax.experimental import pallas as pl
from jax.experimental.pallas import tpu as pltpu


def lstm_fc_kernel(x_ref, wih_ref, whh_ref, b_ref,
                   fc1w_ref, fc1b_ref, fc2w_ref, fc2b_ref,
                   out_ref, gx_ref, *, T, Bp):
    # x_ref:    (T*Bp, D)   time-major, row index = t*Bp + b, batch padded to Bp
    # wih_ref:  (D, 4*Hp)   gate order [i, f, o, g], each gate padded H -> Hp, f32
    # whh_ref:  (Hp, 4*Hp)  bf16 (recurrence matmul runs bf16 x bf16 -> f32 acc)
    # b_ref:    (1, 4*Hp)   (= b_ih + b_hh, reordered & padded), f32
    # fc1w_ref: (Hp, FCP), fc1b_ref: (1, FCP)   FCP = round_up(hidden_dim, 128)
    # fc2w_ref: (1, FCP)
    # fc2b_ref: (1, 1) in SMEM
    # out_ref:  (Bp, 128)   per-batch scalar broadcast across lanes
    # gx_ref:   (T*Bp, 4*Hp) VMEM scratch for the hoisted input projection
    Hp = whh_ref.shape[0]

    # --- Hoisted input projection: one wide MXU matmul + bias, staged in VMEM. ---
    gx_ref[...] = jnp.dot(x_ref[...], wih_ref[...],
                          preferred_element_type=jnp.float32) + b_ref[...]

    whh = whh_ref[...]                               # (Hp, 4Hp) bf16, loaded once
    h = jnp.zeros((Bp, Hp), jnp.float32)
    c = jnp.zeros((Bp, Hp), jnp.float32)

    # --- Recurrence, fully unrolled over the (static, small) time axis. ---
    for t in range(T):
        gx_t = gx_ref[pl.ds(t * Bp, Bp), :]          # exact (8,128)-tile aligned view
        gates = gx_t + jnp.dot(h.astype(jnp.bfloat16), whh,
                               preferred_element_type=jnp.float32)   # (Bp, 4Hp)
        sig = jax.nn.sigmoid(gates[:, : 3 * Hp])     # [i | f | o] in one EUP block
        g = jnp.tanh(gates[:, 3 * Hp:])              # g in one EUP block
        i_g = sig[:, 0 * Hp:1 * Hp]                  # lane-tile aligned slices
        f_g = sig[:, 1 * Hp:2 * Hp]
        o_g = sig[:, 2 * Hp:3 * Hp]
        c = f_g * c + i_g * g
        h = o_g * jnp.tanh(c)
    # padded gate lanes (H..Hp) keep h/c == 0 by construction (zero weight cols,
    # zero bias: sigmoid(0)=0.5 but i_pad*g_pad = 0.5*0 and c starts at 0).

    # --- fc head: Linear -> ReLU -> Dropout(eval: identity) -> Linear. ---
    z = jnp.dot(h, fc1w_ref[...], preferred_element_type=jnp.float32) + fc1b_ref[...]
    z = jnp.maximum(z, 0.0)                          # (Bp, FCP), full lane tiles
    # fc2 has a single output column: VPU multiply + lane reduce instead of an
    # N=1 MXU matmul; bias scalar comes from SMEM.
    y = jnp.sum(z * fc2w_ref[...], axis=-1, keepdims=True) + fc2b_ref[0, 0]  # (Bp,1)
    # Lane-dense, unmasked full-tile store; wrapper slices [:B, :1].
    out_ref[...] = jnp.broadcast_to(y, out_ref.shape)


def pack_params(p):
    """One-time repack of PyTorch-layout params into the kernel layout:
    gate order [i, f, g, o] -> [i, f, o, g]; each gate zero-padded from H to
    Hp = round_up(H, 128); weights pre-transposed to (in, out); W_hh cast to
    bf16 for the recurrence; fc head padded to FCP = round_up(hidden, 128).
    Call ONCE (at init) and reuse — not on the per-call path."""
    H = p["w_hh"].shape[1]
    Hp = ((H + 127) // 128) * 128
    hidden = p["fc1_w"].shape[0]
    FCP = ((hidden + 127) // 128) * 128

    def reorder_pad_cols(m_t):
        # m_t: (X, 4H) with torch gate order [i, f, g, o] along columns.
        i_b, f_b, g_b, o_b = [m_t[:, k * H:(k + 1) * H] for k in range(4)]
        blocks = [jnp.pad(blk, ((0, 0), (0, Hp - H))) for blk in (i_b, f_b, o_b, g_b)]
        return jnp.concatenate(blocks, axis=1)                                # (X, 4Hp)

    w_ih_p = reorder_pad_cols(p["w_ih"].T)                                    # (D, 4Hp)
    w_hh_p = jnp.pad(reorder_pad_cols(p["w_hh"].T),
                     ((0, Hp - H), (0, 0))).astype(jnp.bfloat16)              # (Hp, 4Hp)
    b_p = reorder_pad_cols((p["b_ih"] + p["b_hh"])[None, :])                  # (1, 4Hp)
    fc1_w_p = jnp.pad(p["fc1_w"].T, ((0, Hp - H), (0, FCP - hidden)))         # (Hp, FCP)
    fc1_b_p = jnp.pad(p["fc1_b"][None, :], ((0, 0), (0, FCP - hidden)))       # (1, FCP)
    fc2_w_p = jnp.pad(p["fc2_w"], ((0, 0), (0, FCP - hidden)))                # (1, FCP)
    fc2_b_p = p["fc2_b"].reshape(1, 1)                                        # (1, 1)
    packed = dict(w_ih=w_ih_p, w_hh=w_hh_p, b=b_p, fc1_w=fc1_w_p,
                  fc1_b=fc1_b_p, fc2_w=fc2_w_p, fc2_b=fc2_b_p)
    return jax.tree_util.tree_map(jax.device_put, packed)


@jax.jit
def meta_classifier_forward(x, packed):
    """x: (B, T, D) float32, batch-first (PyTorch convention).
    packed: pre-packed kernel-layout params from pack_params (computed once)."""
    B, T, D = x.shape
    Bp = ((B + 7) // 8) * 8                     # pad batch to the sublane tile
    Hp = packed["w_hh"].shape[0]

    # Tiny per-call layout plumbing (fused under jit): time-major + batch pad.
    xt = jnp.transpose(x, (1, 0, 2))            # (T, B, D)
    xt = jnp.pad(xt, ((0, 0), (0, Bp - B), (0, 0)))
    x_flat = xt.reshape(T * Bp, D)              # row index = t*Bp + b

    vmem = pl.BlockSpec(memory_space=pltpu.MemorySpace.VMEM)
    smem = pl.BlockSpec(memory_space=pltpu.MemorySpace.SMEM)
    out_padded = pl.pallas_call(
        functools.partial(lstm_fc_kernel, T=T, Bp=Bp),
        out_shape=jax.ShapeDtypeStruct((Bp, 128), jnp.float32),
        in_specs=[vmem, vmem, vmem, vmem, vmem, vmem, vmem, smem],
        out_specs=vmem,
        scratch_shapes=[pltpu.VMEM((T * Bp, 4 * Hp), jnp.float32)],
    )(x_flat, packed["w_ih"], packed["w_hh"], packed["b"],
      packed["fc1_w"], packed["fc1_b"], packed["fc2_w"], packed["fc2_b"])
    return out_padded[:B, :1]                   # (B, 1)


def reference_forward(x, p):
    """Pure-JAX f32 reference with exact PyTorch nn.LSTM semantics (validation)."""
    B, T, D = x.shape
    H = p["w_hh"].shape[1]
    w_ih_t, w_hh_t = p["w_ih"].T, p["w_hh"].T
    b = p["b_ih"] + p["b_hh"]
    h = jnp.zeros((B, H), jnp.float32)
    c = jnp.zeros((B, H), jnp.float32)
    for t in range(T):
        gates = x[:, t, :] @ w_ih_t + h @ w_hh_t + b
        i = jax.nn.sigmoid(gates[:, 0 * H:1 * H])
        f = jax.nn.sigmoid(gates[:, 1 * H:2 * H])
        g = jnp.tanh(gates[:, 2 * H:3 * H])
        o = jax.nn.sigmoid(gates[:, 3 * H:4 * H])
        c = f * c + i * g
        h = o * jnp.tanh(c)
    z = jnp.maximum(h @ p["fc1_w"].T + p["fc1_b"], 0.0)
    return z @ p["fc2_w"].T + p["fc2_b"]


def init_params(key, input_dim, hidden_dim, lstm_hidden_dim=64):
    """Deterministic init with PyTorch-convention parameter shapes."""
    H = lstm_hidden_dim
    ks = jax.random.split(key, 8)
    u = lambda k, shape, b: jax.random.uniform(k, shape, jnp.float32, -b, b)
    s = 1.0 / jnp.sqrt(H)
    s1 = 1.0 / jnp.sqrt(H)            # fc1 fan_in = lstm_hidden_dim
    s2 = 1.0 / jnp.sqrt(hidden_dim)   # fc2 fan_in = hidden_dim
    return {
        "w_ih": u(ks[0], (4 * H, input_dim), s),
        "w_hh": u(ks[1], (4 * H, H), s),
        "b_ih": u(ks[2], (4 * H,), s),
        "b_hh": u(ks[3], (4 * H,), s),
        "fc1_w": u(ks[4], (hidden_dim, H), s1),
        "fc1_b": u(ks[5], (hidden_dim,), s1),
        "fc2_w": u(ks[6], (1, hidden_dim), s2),
        "fc2_b": u(ks[7], (1,), s2),
    }


if __name__ == "__main__":
    B, T, D = 2, 8, 32          # batch, seq, input_dim
    hidden_dim, lstm_hidden = 32, 64

    key = jax.random.PRNGKey(0)
    k_x, k_p = jax.random.split(key)
    x = jax.random.normal(k_x, (B, T, D), jnp.float32)
    params = init_params(k_p, D, hidden_dim, lstm_hidden)

    packed = pack_params(params)            # one-time packing, off the call path

    out = meta_classifier_forward(x, packed)
    out = jax.block_until_ready(out)

    ref = reference_forward(x, params)
    assert out.shape == (B, 1)
    # bf16 recurrence matmul (f32 accumulation) => loosened tolerance vs f32 ref.
    assert jnp.allclose(out, ref, atol=2e-2, rtol=2e-2), (out, ref)

    print("KERNEL_OK")
</pallas_src>

<mosaic_0001>
module attributes {stable_mosaic.version = 11 : i64} {
  func.func @lstm_fc_kernel(%arg0: memref<64x32xf32, #tpu.memory_space<vmem>>, %arg1: memref<32x512xf32, #tpu.memory_space<vmem>>, %arg2: memref<128x512xbf16, #tpu.memory_space<vmem>>, %arg3: memref<1x512xf32, #tpu.memory_space<vmem>>, %arg4: memref<128x128xf32, #tpu.memory_space<vmem>>, %arg5: memref<1x128xf32, #tpu.memory_space<vmem>>, %arg6: memref<1x128xf32, #tpu.memory_space<vmem>>, %arg7: memref<1x1xf32, #tpu.memory_space<smem>>, %arg8: memref<8x128xf32, #tpu.memory_space<vmem>>, %arg9: memref<64x512xf32, #tpu.memory_space<vmem>>) attributes {dimension_semantics = [], scalar_prefetch = 0 : i64, scratch_operands = 1 : i64, tpu.core_type = #tpu.core_type<tc>} {
    %c0 = arith.constant 0 : index
    %c0_0 = arith.constant 0 : index
    %0 = vector.load %arg0[%c0, %c0_0] : memref<64x32xf32, #tpu.memory_space<vmem>>, vector<64x32xf32>
    %c0_1 = arith.constant 0 : index
    %c0_2 = arith.constant 0 : index
    %1 = vector.load %arg1[%c0_1, %c0_2] : memref<32x512xf32, #tpu.memory_space<vmem>>, vector<32x512xf32>
    %cst = arith.constant dense<0.000000e+00> : vector<64x512xf32>
    %2 = tpu.matmul %0, %1, %cst {dimension_numbers = #tpu.dot_dimension_numbers<[1], [0], [0], [1], [0, 0, 1, 1], [], []>} : vector<64x32xf32>, vector<32x512xf32>, vector<64x512xf32> -> vector<64x512xf32>
    %c0_3 = arith.constant 0 : index
    %c0_4 = arith.constant 0 : index
    %3 = vector.load %arg3[%c0_3, %c0_4] : memref<1x512xf32, #tpu.memory_space<vmem>>, vector<1x512xf32>
    %4 = vector.broadcast %3 : vector<1x512xf32> to vector<64x512xf32>
    %5 = arith.addf %2, %4 : vector<64x512xf32>
    %c0_5 = arith.constant 0 : index
    %c0_6 = arith.constant 0 : index
    %6 = vector.load %arg9[%c0_5, %c0_6] : memref<64x512xf32, #tpu.memory_space<vmem>>, vector<64x512xf32>
    tpu.vector_store %arg9[%c0_5, %c0_6], %5 {strides = array<i32>} : memref<64x512xf32, #tpu.memory_space<vmem>>, vector<64x512xf32>,
    %c0_7 = arith.constant 0 : index
    %c0_8 = arith.constant 0 : index
    %7 = vector.load %arg2[%c0_7, %c0_8] : memref<128x512xbf16, #tpu.memory_space<vmem>>, vector<128x512xbf16>
    %cst_9 = arith.constant 0.000000e+00 : f32
    %8 = vector.broadcast %cst_9 : f32 to vector<8x128xf32>
    %cst_10 = arith.constant 0.000000e+00 : f32
    %9 = vector.broadcast %cst_10 : f32 to vector<8x128xf32>
    %c0_11 = arith.constant 0 : index
    %c0_12 = arith.constant 0 : index
    %10 = vector.load %arg9[%c0_11, %c0_12] : memref<64x512xf32, #tpu.memory_space<vmem>>, vector<8x512xf32>
    %11 = arith.truncf %8 : vector<8x128xf32> to vector<8x128xbf16>
    %cst_13 = arith.constant dense<0.000000e+00> : vector<8x512xf32>
    %12 = tpu.matmul %11, %7, %cst_13 {dimension_numbers = #tpu.dot_dimension_numbers<[1], [0], [0], [1], [0, 0, 1, 1], [], []>} : vector<8x128xbf16>, vector<128x512xbf16>, vector<8x512xf32> -> vector<8x512xf32>
    %13 = arith.addf %10, %12 : vector<8x512xf32>
    %14 = vector.extract_strided_slice %13 {offsets = [0, 0], sizes = [8, 384], strides = [1, 1]} : vector<8x512xf32> to vector<8x384xf32>
    %15 = arith.negf %14 : vector<8x384xf32>
    %16 = math.exp %15 : vector<8x384xf32>
    %cst_14 = arith.constant 1.000000e+00 : f32
    %17 = vector.broadcast %cst_14 : f32 to vector<8x384xf32>
    %18 = arith.addf %17, %16 : vector<8x384xf32>
    %19 = arith.divf %17, %18 : vector<8x384xf32>
    %20 = vector.extract_strided_slice %13 {offsets = [0, 384], sizes = [8, 128], strides = [1, 1]} : vector<8x512xf32> to vector<8x128xf32>
    %21 = math.tanh %20 : vector<8x128xf32>
    %22 = vector.extract_strided_slice %19 {offsets = [0, 0], sizes = [8, 128], strides = [1, 1]} : vector<8x384xf32> to vector<8x128xf32>
    %23 = vector.extract_strided_slice %19 {offsets = [0, 128], sizes = [8, 128], strides = [1, 1]} : vector<8x384xf32> to vector<8x128xf32>
    %24 = vector.extract_strided_slice %19 {offsets = [0, 256], sizes = [8, 128], strides = [1, 1]} : vector<8x384xf32> to vector<8x128xf32>
    %25 = arith.mulf %23, %9 : vector<8x128xf32>
    %26 = arith.mulf %22, %21 : vector<8x128xf32>
    %27 = arith.addf %25, %26 : vector<8x128xf32>
    %28 = math.tanh %27 : vector<8x128xf32>
    %29 = arith.mulf %24, %28 : vector<8x128xf32>
    %c8 = arith.constant 8 : index
    %c0_15 = arith.constant 0 : index
    %30 = vector.load %arg9[%c8, %c0_15] : memref<64x512xf32, #tpu.memory_space<vmem>>, vector<8x512xf32>
    %31 = arith.truncf %29 : vector<8x128xf32> to vector<8x128xbf16>
    %cst_16 = arith.constant dense<0.000000e+00> : vector<8x512xf32>
    %32 = tpu.matmul %31, %7, %cst_16 {dimension_numbers = #tpu.dot_dimension_numbers<[1], [0], [0], [1], [0, 0, 1, 1], [], []>} : vector<8x128xbf16>, vector<128x512xbf16>, vector<8x512xf32> -> vector<8x512xf32>
    %33 = arith.addf %30, %32 : vector<8x512xf32>
    %34 = vector.extract_strided_slice %33 {offsets = [0, 0], sizes = [8, 384], strides = [1, 1]} : vector<8x512xf32> to vector<8x384xf32>
    %35 = arith.negf %34 : vector<8x384xf32>
    %36 = math.exp %35 : vector<8x384xf32>
    %cst_17 = arith.constant 1.000000e+00 : f32
    %37 = vector.broadcast %cst_17 : f32 to vector<8x384xf32>
    %38 = arith.addf %37, %36 : vector<8x384xf32>
    %39 = arith.divf %37, %38 : vector<8x384xf32>
    %40 = vector.extract_strided_slice %33 {offsets = [0, 384], sizes = [8, 128], strides = [1, 1]} : vector<8x512xf32> to vector<8x128xf32>
    %41 = math.tanh %40 : vector<8x128xf32>
    %42 = vector.extract_strided_slice %39 {offsets = [0, 0], sizes = [8, 128], strides = [1, 1]} : vector<8x384xf32> to vector<8x128xf32>
    %43 = vector.extract_strided_slice %39 {offsets = [0, 128], sizes = [8, 128], strides = [1, 1]} : vector<8x384xf32> to vector<8x128xf32>
    %44 = vector.extract_strided_slice %39 {offsets = [0, 256], sizes = [8, 128], strides = [1, 1]} : vector<8x384xf32> to vector<8x128xf32>
    %45 = arith.mulf %43, %27 : vector<8x128xf32>
    %46 = arith.mulf %42, %41 : vector<8x128xf32>
    %47 = arith.addf %45, %46 : vector<8x128xf32>
    %48 = math.tanh %47 : vector<8x128xf32>
    %49 = arith.mulf %44, %48 : vector<8x128xf32>
    %c16 = arith.constant 16 : index
    %c0_18 = arith.constant 0 : index
    %50 = vector.load %arg9[%c16, %c0_18] : memref<64x512xf32, #tpu.memory_space<vmem>>, vector<8x512xf32>
    %51 = arith.truncf %49 : vector<8x128xf32> to vector<8x128xbf16>
    %cst_19 = arith.constant dense<0.000000e+00> : vector<8x512xf32>
    %52 = tpu.matmul %51, %7, %cst_19 {dimension_numbers = #tpu.dot_dimension_numbers<[1], [0], [0], [1], [0, 0, 1, 1], [], []>} : vector<8x128xbf16>, vector<128x512xbf16>, vector<8x512xf32> -> vector<8x512xf32>
    %53 = arith.addf %50, %52 : vector<8x512xf32>
    %54 = vector.extract_strided_slice %53 {offsets = [0, 0], sizes = [8, 384], strides = [1, 1]} : vector<8x512xf32> to vector<8x384xf32>
    %55 = arith.negf %54 : vector<8x384xf32>
    %56 = math.exp %55 : vector<8x384xf32>
    %cst_20 = arith.constant 1.000000e+00 : f32
    %57 = vector.broadcast %cst_20 : f32 to vector<8x384xf32>
    %58 = arith.addf %57, %56 : vector<8x384xf32>
    %59 = arith.divf %57, %58 : vector<8x384xf32>
    %60 = vector.extract_strided_slice %53 {offsets = [0, 384], sizes = [8, 128], strides = [1, 1]} : vector<8x512xf32> to vector<8x128xf32>
    %61 = math.tanh %60 : vector<8x128xf32>
    %62 = vector.extract_strided_slice %59 {offsets = [0, 0], sizes = [8, 128], strides = [1, 1]} : vector<8x384xf32> to vector<8x128xf32>
    %63 = vector.extract_strided_slice %59 {offsets = [0, 128], sizes = [8, 128], strides = [1, 1]} : vector<8x384xf32> to vector<8x128xf32>
    %64 = vector.extract_strided_slice %59 {offsets = [0, 256], sizes = [8, 128], strides = [1, 1]} : vector<8x384xf32> to vector<8x128xf32>
    %65 = arith.mulf %63, %47 : vector<8x128xf32>
    %66 = arith.mulf %62, %61 : vector<8x128xf32>
    %67 = arith.addf %65, %66 : vector<8x128xf32>
    %68 = math.tanh %67 : vector<8x128xf32>
    %69 = arith.mulf %64, %68 : vector<8x128xf32>
    %c24 = arith.constant 24 : index
    %c0_21 = arith.constant 0 : index
    %70 = vector.load %arg9[%c24, %c0_21] : memref<64x512xf32, #tpu.memory_space<vmem>>, vector<8x512xf32>
    %71 = arith.truncf %69 : vector<8x128xf32> to vector<8x128xbf16>
    %cst_22 = arith.constant dense<0.000000e+00> : vector<8x512xf32>
    %72 = tpu.matmul %71, %7, %cst_22 {dimension_numbers = #tpu.dot_dimension_numbers<[1], [0], [0], [1], [0, 0, 1, 1], [], []>} : vector<8x128xbf16>, vector<128x512xbf16>, vector<8x512xf32> -> vector<8x512xf32>
    %73 = arith.addf %70, %72 : vector<8x512xf32>
    %74 = vector.extract_strided_slice %73 {offsets = [0, 0], sizes = [8, 384], strides = [1, 1]} : vector<8x512xf32> to vector<8x384xf32>
    %75 = arith.negf %74 : vector<8x384xf32>
    %76 = math.exp %75 : vector<8x384xf32>
    %cst_23 = arith.constant 1.000000e+00 : f32
    %77 = vector.broadcast %cst_23 : f32 to vector<8x384xf32>
    %78 = arith.addf %77, %76 : vector<8x384xf32>
    %79 = arith.divf %77, %78 : vector<8x384xf32>
    %80 = vector.extract_strided_slice %73 {offsets = [0, 384], sizes = [8, 128], strides = [1, 1]} : vector<8x512xf32> to vector<8x128xf32>
    %81 = math.tanh %80 : vector<8x128xf32>
    %82 = vector.extract_strided_slice %79 {offsets = [0, 0], sizes = [8, 128], strides = [1, 1]} : vector<8x384xf32> to vector<8x128xf32>
    %83 = vector.extract_strided_slice %79 {offsets = [0, 128], sizes = [8, 128], strides = [1, 1]} : vector<8x384xf32> to vector<8x128xf32>
    %84 = vector.extract_strided_slice %79 {offsets = [0, 256], sizes = [8, 128], strides = [1, 1]} : vector<8x384xf32> to vector<8x128xf32>
    %85 = arith.mulf %83, %67 : vector<8x128xf32>
    %86 = arith.mulf %82, %81 : vector<8x128xf32>
    %87 = arith.addf %85, %86 : vector<8x128xf32>
    %88 = math.tanh %87 : vector<8x128xf32>
    %89 = arith.mulf %84, %88 : vector<8x128xf32>
    %c32 = arith.constant 32 : index
    %c0_24 = arith.constant 0 : index
    %90 = vector.load %arg9[%c32, %c0_24] : memref<64x512xf32, #tpu.memory_space<vmem>>, vector<8x512xf32>
    %91 = arith.truncf %89 : vector<8x128xf32> to vector<8x128xbf16>
    %cst_25 = arith.constant dense<0.000000e+00> : vector<8x512xf32>
    %92 = tpu.matmul %91, %7, %cst_25 {dimension_numbers = #tpu.dot_dimension_numbers<[1], [0], [0], [1], [0, 0, 1, 1], [], []>} : vector<8x128xbf16>, vector<128x512xbf16>, vector<8x512xf32> -> vector<8x512xf32>
    %93 = arith.addf %90, %92 : vector<8x512xf32>
    %94 = vector.extract_strided_slice %93 {offsets = [0, 0], sizes = [8, 384], strides = [1, 1]} : vector<8x512xf32> to vector<8x384xf32>
    %95 = arith.negf %94 : vector<8x384xf32>
    %96 = math.exp %95 : vector<8x384xf32>
    %cst_26 = arith.constant 1.000000e+00 : f32
    %97 = vector.broadcast %cst_26 : f32 to vector<8x384xf32>
    %98 = arith.addf %97, %96 : vector<8x384xf32>
    %99 = arith.divf %97, %98 : vector<8x384xf32>
    %100 = vector.extract_strided_slice %93 {offsets = [0, 384], sizes = [8, 128], strides = [1, 1]} : vector<8x512xf32> to vector<8x128xf32>
    %101 = math.tanh %100 : vector<8x128xf32>
    %102 = vector.extract_strided_slice %99 {offsets = [0, 0], sizes = [8, 128], strides = [1, 1]} : vector<8x384xf32> to vector<8x128xf32>
    %103 = vector.extract_strided_slice %99 {offsets = [0, 128], sizes = [8, 128], strides = [1, 1]} : vector<8x384xf32> to vector<8x128xf32>
    %104 = vector.extract_strided_slice %99 {offsets = [0, 256], sizes = [8, 128], strides = [1, 1]} : vector<8x384xf32> to vector<8x128xf32>
    %105 = arith.mulf %103, %87 : vector<8x128xf32>
    %106 = arith.mulf %102, %101 : vector<8x128xf32>
    %107 = arith.addf %105, %106 : vector<8x128xf32>
    %108 = math.tanh %107 : vector<8x128xf32>
    %109 = arith.mulf %104, %108 : vector<8x128xf32>
    %c40 = arith.constant 40 : index
    %c0_27 = arith.constant 0 : index
    %110 = vector.load %arg9[%c40, %c0_27] : memref<64x512xf32, #tpu.memory_space<vmem>>, vector<8x512xf32>
    %111 = arith.truncf %109 : vector<8x128xf32> to vector<8x128xbf16>
    %cst_28 = arith.constant dense<0.000000e+00> : vector<8x512xf32>
    %112 = tpu.matmul %111, %7, %cst_28 {dimension_numbers = #tpu.dot_dimension_numbers<[1], [0], [0], [1], [0, 0, 1, 1], [], []>} : vector<8x128xbf16>, vector<128x512xbf16>, vector<8x512xf32> -> vector<8x512xf32>
    %113 = arith.addf %110, %112 : vector<8x512xf32>
    %114 = vector.extract_strided_slice %113 {offsets = [0, 0], sizes = [8, 384], strides = [1, 1]} : vector<8x512xf32> to vector<8x384xf32>
    %115 = arith.negf %114 : vector<8x384xf32>
    %116 = math.exp %115 : vector<8x384xf32>
    %cst_29 = arith.constant 1.000000e+00 : f32
    %117 = vector.broadcast %cst_29 : f32 to vector<8x384xf32>
    %118 = arith.addf %117, %116 : vector<8x384xf32>
    %119 = arith.divf %117, %118 : vector<8x384xf32>
    %120 = vector.extract_strided_slice %113 {offsets = [0, 384], sizes = [8, 128], strides = [1, 1]} : vector<8x512xf32> to vector<8x128xf32>
    %121 = math.tanh %120 : vector<8x128xf32>
    %122 = vector.extract_strided_slice %119 {offsets = [0, 0], sizes = [8, 128], strides = [1, 1]} : vector<8x384xf32> to vector<8x128xf32>
    %123 = vector.extract_strided_slice %119 {offsets = [0, 128], sizes = [8, 128], strides = [1, 1]} : vector<8x384xf32> to vector<8x128xf32>
    %124 = vector.extract_strided_slice %119 {offsets = [0, 256], sizes = [8, 128], strides = [1, 1]} : vector<8x384xf32> to vector<8x128xf32>
    %125 = arith.mulf %123, %107 : vector<8x128xf32>
    %126 = arith.mulf %122, %121 : vector<8x128xf32>
    %127 = arith.addf %125, %126 : vector<8x128xf32>
    %128 = math.tanh %127 : vector<8x128xf32>
    %129 = arith.mulf %124, %128 : vector<8x128xf32>
    %c48 = arith.constant 48 : index
    %c0_30 = arith.constant 0 : index
    %130 = vector.load %arg9[%c48, %c0_30] : memref<64x512xf32, #tpu.memory_space<vmem>>, vector<8x512xf32>
    %131 = arith.truncf %129 : vector<8x128xf32> to vector<8x128xbf16>
    %cst_31 = arith.constant dense<0.000000e+00> : vector<8x512xf32>
    %132 = tpu.matmul %131, %7, %cst_31 {dimension_numbers = #tpu.dot_dimension_numbers<[1], [0], [0], [1], [0, 0, 1, 1], [], []>} : vector<8x128xbf16>, vector<128x512xbf16>, vector<8x512xf32> -> vector<8x512xf32>
    %133 = arith.addf %130, %132 : vector<8x512xf32>
    %134 = vector.extract_strided_slice %133 {offsets = [0, 0], sizes = [8, 384], strides = [1, 1]} : vector<8x512xf32> to vector<8x384xf32>
    %135 = arith.negf %134 : vector<8x384xf32>
    %136 = math.exp %135 : vector<8x384xf32>
    %cst_32 = arith.constant 1.000000e+00 : f32
    %137 = vector.broadcast %cst_32 : f32 to vector<8x384xf32>
    %138 = arith.addf %137, %136 : vector<8x384xf32>
    %139 = arith.divf %137, %138 : vector<8x384xf32>
    %140 = vector.extract_strided_slice %133 {offsets = [0, 384], sizes = [8, 128], strides = [1, 1]} : vector<8x512xf32> to vector<8x128xf32>
    %141 = math.tanh %140 : vector<8x128xf32>
    %142 = vector.extract_strided_slice %139 {offsets = [0, 0], sizes = [8, 128], strides = [1, 1]} : vector<8x384xf32> to vector<8x128xf32>
    %143 = vector.extract_strided_slice %139 {offsets = [0, 128], sizes = [8, 128], strides = [1, 1]} : vector<8x384xf32> to vector<8x128xf32>
    %144 = vector.extract_strided_slice %139 {offsets = [0, 256], sizes = [8, 128], strides = [1, 1]} : vector<8x384xf32> to vector<8x128xf32>
    %145 = arith.mulf %143, %127 : vector<8x128xf32>
    %146 = arith.mulf %142, %141 : vector<8x128xf32>
    %147 = arith.addf %145, %146 : vector<8x128xf32>
    %148 = math.tanh %147 : vector<8x128xf32>
    %149 = arith.mulf %144, %148 : vector<8x128xf32>
    %c56 = arith.constant 56 : index
    %c0_33 = arith.constant 0 : index
    %150 = vector.load %arg9[%c56, %c0_33] : memref<64x512xf32, #tpu.memory_space<vmem>>, vector<8x512xf32>
    %151 = arith.truncf %149 : vector<8x128xf32> to vector<8x128xbf16>
    %cst_34 = arith.constant dense<0.000000e+00> : vector<8x512xf32>
    %152 = tpu.matmul %151, %7, %cst_34 {dimension_numbers = #tpu.dot_dimension_numbers<[1], [0], [0], [1], [0, 0, 1, 1], [], []>} : vector<8x128xbf16>, vector<128x512xbf16>, vector<8x512xf32> -> vector<8x512xf32>
    %153 = arith.addf %150, %152 : vector<8x512xf32>
    %154 = vector.extract_strided_slice %153 {offsets = [0, 0], sizes = [8, 384], strides = [1, 1]} : vector<8x512xf32> to vector<8x384xf32>
    %155 = arith.negf %154 : vector<8x384xf32>
    %156 = math.exp %155 : vector<8x384xf32>
    %cst_35 = arith.constant 1.000000e+00 : f32
    %157 = vector.broadcast %cst_35 : f32 to vector<8x384xf32>
    %158 = arith.addf %157, %156 : vector<8x384xf32>
    %159 = arith.divf %157, %158 : vector<8x384xf32>
    %160 = vector.extract_strided_slice %153 {offsets = [0, 384], sizes = [8, 128], strides = [1, 1]} : vector<8x512xf32> to vector<8x128xf32>
    %161 = math.tanh %160 : vector<8x128xf32>
    %162 = vector.extract_strided_slice %159 {offsets = [0, 0], sizes = [8, 128], strides = [1, 1]} : vector<8x384xf32> to vector<8x128xf32>
    %163 = vector.extract_strided_slice %159 {offsets = [0, 128], sizes = [8, 128], strides = [1, 1]} : vector<8x384xf32> to vector<8x128xf32>
    %164 = vector.extract_strided_slice %159 {offsets = [0, 256], sizes = [8, 128], strides = [1, 1]} : vector<8x384xf32> to vector<8x128xf32>
    %165 = arith.mulf %163, %147 : vector<8x128xf32>
    %166 = arith.mulf %162, %161 : vector<8x128xf32>
    %167 = arith.addf %165, %166 : vector<8x128xf32>
    %168 = math.tanh %167 : vector<8x128xf32>
    %169 = arith.mulf %164, %168 : vector<8x128xf32>
    %c0_36 = arith.constant 0 : index
    %c0_37 = arith.constant 0 : index
    %170 = vector.load %arg4[%c0_36, %c0_37] : memref<128x128xf32, #tpu.memory_space<vmem>>, vector<128x128xf32>
    %cst_38 = arith.constant dense<0.000000e+00> : vector<8x128xf32>
    %171 = tpu.matmul %169, %170, %cst_38 {dimension_numbers = #tpu.dot_dimension_numbers<[1], [0], [0], [1], [0, 0, 1, 1], [], []>} : vector<8x128xf32>, vector<128x128xf32>, vector<8x128xf32> -> vector<8x128xf32>
    %c0_39 = arith.constant 0 : index
    %c0_40 = arith.constant 0 : index
    %172 = vector.load %arg5[%c0_39, %c0_40] : memref<1x128xf32, #tpu.memory_space<vmem>>, vector<1x128xf32>
    %173 = vector.broadcast %172 : vector<1x128xf32> to vector<8x128xf32>
    %174 = arith.addf %171, %173 : vector<8x128xf32>
    %cst_41 = arith.constant 0.000000e+00 : f32
    %175 = vector.broadcast %cst_41 : f32 to vector<8x128xf32>
    %176 = arith.maximumf %174, %175 : vector<8x128xf32>
    %c0_42 = arith.constant 0 : index
    %c0_43 = arith.constant 0 : index
    %177 = vector.load %arg6[%c0_42, %c0_43] : memref<1x128xf32, #tpu.memory_space<vmem>>, vector<1x128xf32>
    %178 = vector.broadcast %177 : vector<1x128xf32> to vector<8x128xf32>
    %179 = arith.mulf %176, %178 : vector<8x128xf32>
    %cst_44 = arith.constant dense<0.000000e+00> : vector<8xf32>
    %180 = vector.multi_reduction <add>, %179, %cst_44 [1] : vector<8x128xf32> to vector<8xf32>
    %181 = vector.shape_cast %180 : vector<8xf32> to vector<8x1xf32>
    %c0_45 = arith.constant 0 : index
    %c0_46 = arith.constant 0 : index
    %182 = memref.load %arg7[%c0_45, %c0_46] : memref<1x1xf32, #tpu.memory_space<smem>>
    %183 = vector.broadcast %182 : f32 to vector<8x1xf32>
    %184 = arith.addf %181, %183 : vector<8x1xf32>
    %185 = vector.shape_cast %184 : vector<8x1xf32> to vector<8x1xf32>
    %186 = vector.broadcast %185 : vector<8x1xf32> to vector<8x128xf32>
    %c0_47 = arith.constant 0 : index
    %c0_48 = arith.constant 0 : index
    %187 = vector.load %arg8[%c0_47, %c0_48] : memref<8x128xf32, #tpu.memory_space<vmem>>, vector<8x128xf32>
    tpu.vector_store %arg8[%c0_47, %c0_48], %186 {strides = array<i32>} : memref<8x128xf32, #tpu.memory_space<vmem>>, vector<8x128xf32>,
    return
  }
}

</mosaic_0001>

<llo_original>
// kernel: meta_classifier_forward.1
$region0: #{meta_classifier_forward.1}
  #allocation0 [shape = 'u32[]', space=smem, size = 0x4, offset = 0x4, fixed_abs, tag = 'smem constant byte address 0x4 - core index']
  #allocation1 [shape = 'u32[144,128]{1,0:T(1,128)}', space=vmem, size = 0x12000, scoped, tag = 'internal scratch']
  #allocation2 [shape = 'f32[64,512]{1,0:T(8,128)}', space=vmem, size = 0x20000, scoped, tag = 'scratch operand']
  #allocation3 [shape = 'f32[1,1]{1,0:T(1,128)S(6)}', space=smem, size = 0x200, scoped, tag = 'scoped memory for meta_classifier_forward.1']
  %s0 = inlined_call_operand.vmem [shape: f32[64,32], index: 0, kind: input, shape index: {}]
  %s1 = inlined_call_operand.hbm [shape: f32[32,512], index: 1, kind: input, shape index: {}]
  %s2 = inlined_call_operand.hbm [shape: bf16[128,512], index: 2, kind: input, shape index: {}]
  %s3 = inlined_call_operand.hbm [shape: f32[1,512], index: 3, kind: input, shape index: {}]
  %s4 = inlined_call_operand.vmem [shape: f32[128,128], index: 4, kind: input, shape index: {}]
  %s5 = inlined_call_operand.vmem [shape: f32[1,128], index: 5, kind: input, shape index: {}]
  %s6 = inlined_call_operand.vmem [shape: f32[1,128], index: 6, kind: input, shape index: {}]
  %s7 = inlined_call_operand.<no memory space> [shape: f32[1,1], index: 7, kind: input, shape index: {}]
  %s8 = inlined_call_operand.vmem [shape: f32[8,128], index: 8, kind: output, shape index: {}]
  %s9 = sld [smem:[#allocation0]]
  $region54: #{meta_classifier_forward.1} parent=0
    _
  %s11 = ssub.s32 1, %s9
  %s12 = scalar_select 0, %s11, %s9
  %13 = sst [smem:[#allocation3]] %s7
  $region1: #{meta_classifier_forward.1} parent=0
    #allocation4 [shape = 'u8[65536]{0}', space=vmem, size = 0x10000, scoped, tag = 'input window, operand 1, single buffered']
    #allocation5 [shape = 's32[1]{0}', space=sflag, size = 0x4, scoped, tag = 'scoped memory for meta_classifier_forward.1']
    #allocation6 [shape = 'u8[131072]{0}', space=vmem, size = 0x20000, scoped, tag = 'input window, operand 2, single buffered']
    #allocation7 [shape = 's32[1]{0}', space=sflag, size = 0x4, scoped, tag = 'scoped memory for meta_classifier_forward.1']
    #allocation8 [shape = 'u8[2048]{0}', space=vmem, size = 0x800, scoped, tag = 'input window, operand 3, single buffered']
    %14 = vsyncpa [#allocation5], 0
    %15 = vsyncpa [#allocation7], 0
    // Predicated region
    $region2: #{meta_classifier_forward.1} parent=1 // pred_check
      _
    $region3: #{meta_classifier_forward.1} parent=1 // pred_check_branch
      %17 = sbr.rel (0) target = $region5
    $region4: #{meta_classifier_forward.1} parent=1 // pred_region
      _
    $region5: #{meta_classifier_forward.1} parent=1 // pred_fallthru
      _
    // Predicated region
    $region6: #{meta_classifier_forward.1} parent=1 // pred_check
      _
    $region7: #{meta_classifier_forward.1} parent=1 // pred_check_branch
      %19 = sbr.rel (0) target = $region9
    $region8: #{meta_classifier_forward.1} parent=1 // pred_region
      %s21 = ssub.s32 2048, 2048
      %22 = vsyncadd [#allocation5], %s21
      %s23 = sshll.u32 [#allocation4], 4
      %s24 = int_to_ptr.vmem [resolvable:$true] %s23
      %29 = dma.hbm_to_vmem [thread:$0]  %s1, 2048, %s24, [#allocation5], 512, 512, 32
    $region9: #{meta_classifier_forward.1} parent=1 // pred_fallthru
      _
    // Predicated region
    $region10: #{meta_classifier_forward.1} parent=1 // pred_check
      _
    $region11: #{meta_classifier_forward.1} parent=1 // pred_check_branch
      %31 = sbr.rel (0) target = $region13
    $region12: #{meta_classifier_forward.1} parent=1 // pred_region
      %s33 = ssub.s32 4096, 4096
      %34 = vsyncadd [#allocation7], %s33
      %s35 = sshll.u32 [#allocation6], 4
      %s36 = int_to_ptr.vmem [resolvable:$true] %s35
      %41 = dma.hbm_to_vmem [thread:$0]  %s2, 4096, %s36, [#allocation7], 256, 256, 16
    $region13: #{meta_classifier_forward.1} parent=1 // pred_fallthru
      _
    // Predicated region
    $region14: #{meta_classifier_forward.1} parent=1 // pred_check
      _
    $region15: #{meta_classifier_forward.1} parent=1 // pred_check_branch
      %43 = sbr.rel (0) target = $region17
    $region16: #{meta_classifier_forward.1} parent=1 // pred_region
      %s45 = ssub.s32 64, 64
      %46 = vsyncadd [#allocation7], %s45
      %s48 = sshll.u32 [#allocation8], 4
      %s49 = int_to_ptr.vmem [resolvable:$true] %s48
      %51 = dma.hbm_to_vmem [thread:$0]  %s3, 64, %s49, [#allocation7]
    $region17: #{meta_classifier_forward.1} parent=1 // pred_fallthru
      _
    // Predicated region
    $region18: #{meta_classifier_forward.1} parent=1 // pred_check
      _
    $region19: #{meta_classifier_forward.1} parent=1 // pred_check_branch
      %53 = sbr.rel (0) target = $region21
    $region20: #{meta_classifier_forward.1} parent=1 // pred_region
      _
    $region21: #{meta_classifier_forward.1} parent=1 // pred_fallthru
      _
    // Predicated region
    $region22: #{meta_classifier_forward.1} parent=1 // pred_check
      _
    $region23: #{meta_classifier_forward.1} parent=1 // pred_check_branch
      %55 = sbr.rel (0) target = $region25
    $region24: #{meta_classifier_forward.1} parent=1 // pred_region
      _
    $region25: #{meta_classifier_forward.1} parent=1 // pred_fallthru
      _
    // Predicated region
    $region26: #{meta_classifier_forward.1} parent=1 // pred_check
      _
    $region27: #{meta_classifier_forward.1} parent=1 // pred_check_branch
      %57 = sbr.rel (0) target = $region29
    $region28: #{meta_classifier_forward.1} parent=1 // pred_region
      _
    $region29: #{meta_classifier_forward.1} parent=1 // pred_fallthru
      _
    // Predicated region
    $region30: #{meta_classifier_forward.1} parent=1 // pred_check
      _
    $region31: #{meta_classifier_forward.1} parent=1 // pred_check_branch
      %59 = sbr.rel (0) target = $region33
    $region32: #{meta_classifier_forward.1} parent=1 // pred_region
      _
    $region33: #{meta_classifier_forward.1} parent=1 // pred_fallthru
      _
    // Predicated region
    $region34: #{meta_classifier_forward.1} parent=1 // pred_check
      _
    $region35: #{meta_classifier_forward.1} parent=1 // pred_check_branch
      %61 = sbr.rel (0) target = $region37
    $region36: #{meta_classifier_forward.1} parent=1 // pred_region
      %62 = dma.done [#allocation5], 2048
    $region37: #{meta_classifier_forward.1} parent=1 // pred_fallthru
      _
    // Predicated region
    $region38: #{meta_classifier_forward.1} parent=1 // pred_check
      _
    $region39: #{meta_classifier_forward.1} parent=1 // pred_check_branch
      %64 = sbr.rel (0) target = $region41
    $region40: #{meta_classifier_forward.1} parent=1 // pred_region
      %65 = dma.done [#allocation7], 4096
    $region41: #{meta_classifier_forward.1} parent=1 // pred_fallthru
      _
    // Predicated region
    $region42: #{meta_classifier_forward.1} parent=1 // pred_check
      _
    $region43: #{meta_classifier_forward.1} parent=1 // pred_check_branch
      %67 = sbr.rel (0) target = $region45
    $region44: #{meta_classifier_forward.1} parent=1 // pred_region
      %68 = dma.done [#allocation7], 64
    $region45: #{meta_classifier_forward.1} parent=1 // pred_fallthru
      _
    %v70 = vld [vmem:[%s0] sm:$0xff]
    %v71 = vld [vmem:[%s0 + $0x8] sm:$0xff]
    %v72 = vld [vmem:[%s0 + $0x10] sm:$0xff]
    %v73 = vld [vmem:[%s0 + $0x18] sm:$0xff]
    %v74 = vld [vmem:[%s0 + $0x20] sm:$0xff]
    %v75 = vld [vmem:[%s0 + $0x28] sm:$0xff]
    %v76 = vld [vmem:[%s0 + $0x30] sm:$0xff]
    %v77 = vld [vmem:[%s0 + $0x38] sm:$0xff]
    %v78 = vld [vmem:[#allocation4] sm:$0xff]
    %v79 = vld [vmem:[#allocation4 + $0x8] sm:$0xff]
    %v80 = vld [vmem:[#allocation4 + $0x10] sm:$0xff]
    %v81 = vld [vmem:[#allocation4 + $0x18] sm:$0xff]
    %v82 = vld [vmem:[#allocation4 + $0x20] sm:$0xff]
    %v83 = vld [vmem:[#allocation4 + $0x28] sm:$0xff]
    %v84 = vld [vmem:[#allocation4 + $0x30] sm:$0xff]
    %v85 = vld [vmem:[#allocation4 + $0x38] sm:$0xff]
    %v86 = vld [vmem:[#allocation4 + $0x40] sm:$0xff]
    %v87 = vld [vmem:[#allocation4 + $0x48] sm:$0xff]
    %v88 = vld [vmem:[#allocation4 + $0x50] sm:$0xff]
    %v89 = vld [vmem:[#allocation4 + $0x58] sm:$0xff]
    %v90 = vld [vmem:[#allocation4 + $0x60] sm:$0xff]
    %v91 = vld [vmem:[#allocation4 + $0x68] sm:$0xff]
    %v92 = vld [vmem:[#allocation4 + $0x70] sm:$0xff]
    %v93 = vld [vmem:[#allocation4 + $0x78] sm:$0xff]
    %v94 = vld [vmem:[#allocation8] sm:$0xf]
    %v96 = vlaneseq
    %v97 = vshrl.u32 %v96, 7
    %v98 = vsub.s32 0, %v97
    %v99 = vrot.slane %v94, %v98
    %v100 = vlaneseq
    %v101 = vshrl.u32 %v100, 7
    %v102 = vsub.s32 1, %v101
    %v103 = vrot.slane %v94, %v102
    %v104 = vlaneseq
    %v105 = vshrl.u32 %v104, 7
    %v106 = vsub.s32 2, %v105
    %v107 = vrot.slane %v94, %v106
    %v108 = vlaneseq
    %v109 = vshrl.u32 %v108, 7
    %v110 = vsub.s32 3, %v109
    %v111 = vrot.slane %v94, %v110
    %vm116 = vcmask 261120
    %v118 = vsel %vm116, %v70, 0
    %v121 = vsel %vm116, %v71, 0
    %v124 = vsel %vm116, %v72, 0
    %v127 = vsel %vm116, %v73, 0
    %v130 = vsel %vm116, %v74, 0
    %v133 = vsel %vm116, %v75, 0
    %v136 = vsel %vm116, %v76, 0
    %v139 = vsel %vm116, %v77, 0
    %141 = vmatprep.subr.mxu0 %v79
    %142 = vmatpush1.msra.mxu0 %v78
    %143 = vmatprep.subr.mxu0 %v83
    %144 = vmatpush1.msra.mxu0 %v82
    %145 = vmatprep.subr.mxu0 %v87
    %146 = vmatpush1.msra.mxu0 %v86
    %147 = vmatprep.subr.mxu0 %v91
    %148 = vmatpush1.msra.mxu0 %v90
    %149 = vmatprep.subr.mxu0 0.0
    %150 = vmatpush1.msra.mxu0 0.0
    %151 = vmatprep.subr.mxu0 0.0
    %152 = vmatpush1.msra.mxu0 0.0
    %153 = vmatprep.subr.mxu0 0.0
    %154 = vmatpush1.msra.mxu0 0.0
    %155 = vmatprep.subr.mxu0 0.0
    %156 = vmatpush1.msra.mxu0 0.0
    %157 = vmatprep.subr.mxu0 0.0
    %158 = vmatpush1.msra.mxu0 0.0
    %159 = vmatprep.subr.mxu0 0.0
    %160 = vmatpush1.msra.mxu0 0.0
    %161 = vmatprep.subr.mxu0 0.0
    %162 = vmatpush1.msra.mxu0 0.0
    %163 = vmatprep.subr.mxu0 0.0
    %164 = vmatpush1.msra.mxu0 0.0
    %165 = vmatprep.subr.mxu0 0.0
    %166 = vmatpush1.msra.mxu0 0.0
    %167 = vmatprep.subr.mxu0 0.0
    %168 = vmatpush1.msra.mxu0 0.0
    %169 = vmatprep.subr.mxu0 0.0
    %170 = vmatpush1.msra.mxu0 0.0
    %171 = vmatprep.subr.mxu0 0.0
    %172 = vmatpush1.msra.mxu0 0.0
    %173 = vmatprep.subr.mxu0 0.0
    %174 = vmatpush1.msra.mxu0 0.0
    %175 = vmatprep.subr.mxu0 0.0
    %176 = vmatpush1.msra.mxu0 0.0
    %177 = vmatprep.subr.mxu0 0.0
    %178 = vmatpush1.msra.mxu0 0.0
    %179 = vmatprep.subr.mxu0 0.0
    %180 = vmatpush1.msra.mxu0 0.0
    %181 = vmatprep.subr.mxu0 0.0
    %182 = vmatpush1.msra.mxu0 0.0
    %183 = vmatprep.subr.mxu0 0.0
    %184 = vmatpush1.msra.mxu0 0.0
    %185 = vmatprep.subr.mxu0 0.0
    %186 = vmatpush1.msra.mxu0 0.0
    %187 = vmatprep.subr.mxu0 0.0
    %188 = vmatpush1.msra.mxu0 0.0
    %189 = vmatprep.subr.mxu0 0.0
    %190 = vmatpush1.msra.mxu0 0.0
    %191 = vmatprep.subr.mxu0 0.0
    %192 = vmatpush1.msra.mxu0 0.0
    %193 = vmatprep.subr.mxu0 0.0
    %194 = vmatpush1.msra.mxu0 0.0
    %195 = vmatprep.subr.mxu0 0.0
    %196 = vmatpush1.msra.mxu0 0.0
    %197 = vmatprep.subr.mxu0 0.0
    %198 = vmatpush1.msra.mxu0 0.0
    %199 = vmatprep.subr.mxu0 0.0
    %200 = vmatpush1.msra.mxu0 0.0
    %201 = vmatprep.subr.mxu0 0.0
    %202 = vmatpush1.msra.mxu0 0.0
    %203 = vmatprep.subr.mxu0 0.0
    %204 = vmatpush1.msra.mxu0 0.0
    %205 = vmatprep.mubr.f32.mxu0 0.0
    %206 = vmatmul.mubr.f32.gmra.mrb[0].mxu0 %v118
    %v207 = vpop.f32.mrb[0].mxu0
    %v208 = vadd.f32 %v99, %v207
    %v209 = vpop.f32.mrb[0].mxu0
    %v210 = vadd.f32 %v103, %v209
    %211 = vmatprep.mubr.f32.mxu0 0.0
    %212 = vmatmul.mubr.f32.gmra.mrb[0].mxu0 %v121
    %v213 = vpop.f32.mrb[0].mxu0
    %v214 = vadd.f32 %v99, %v213
    %v215 = vpop.f32.mrb[0].mxu0
    %v216 = vadd.f32 %v103, %v215
    %217 = vmatprep.mubr.f32.mxu0 0.0
    %218 = vmatmul.mubr.f32.gmra.mrb[0].mxu0 %v124
    %v219 = vpop.f32.mrb[0].mxu0
    %v220 = vadd.f32 %v99, %v219
    %v221 = vpop.f32.mrb[0].mxu0
    %v222 = vadd.f32 %v103, %v221
    %223 = vmatprep.mubr.f32.mxu0 0.0
    %224 = vmatmul.mubr.f32.gmra.mrb[0].mxu0 %v127
    %v225 = vpop.f32.mrb[0].mxu0
    %v226 = vadd.f32 %v99, %v225
    %v227 = vpop.f32.mrb[0].mxu0
    %v228 = vadd.f32 %v103, %v227
    %229 = vmatprep.mubr.f32.mxu0 0.0
    %230 = vmatmul.mubr.f32.gmra.mrb[0].mxu0 %v130
    %v231 = vpop.f32.mrb[0].mxu0
    %v232 = vadd.f32 %v99, %v231
    %v233 = vpop.f32.mrb[0].mxu0
    %v234 = vadd.f32 %v103, %v233
    %235 = vmatprep.mubr.f32.mxu0 0.0
    %236 = vmatmul.mubr.f32.gmra.mrb[0].mxu0 %v133
    %v237 = vpop.f32.mrb[0].mxu0
    %v238 = vadd.f32 %v99, %v237
    %v239 = vpop.f32.mrb[0].mxu0
    %v240 = vadd.f32 %v103, %v239
    %241 = vmatprep.mubr.f32.mxu0 0.0
    %242 = vmatmul.mubr.f32.gmra.mrb[0].mxu0 %v136
    %v243 = vpop.f32.mrb[0].mxu0
    %v244 = vadd.f32 %v99, %v243
    %v245 = vpop.f32.mrb[0].mxu0
    %v246 = vadd.f32 %v103, %v245
    %247 = vmatprep.mubr.f32.mxu0 0.0
    %248 = vmatmul.mubr.f32.gmra.mrb[0].mxu0 %v139
    %v249 = vpop.f32.mrb[0].mxu0
    %v250 = vadd.f32 %v99, %v249
    %v251 = vpop.f32.mrb[0].mxu0
    %v252 = vadd.f32 %v103, %v251
    %253 = vdwg.mxu0
    %254 = vmatprep.subr.mxu0 %v81
    %255 = vmatpush1.msra.mxu0 %v80
    %256 = vmatprep.subr.mxu0 %v85
    %257 = vmatpush1.msra.mxu0 %v84
    %258 = vmatprep.subr.mxu0 %v89
    %259 = vmatpush1.msra.mxu0 %v88
    %260 = vmatprep.subr.mxu0 %v93
    %261 = vmatpush1.msra.mxu0 %v92
    %262 = vmatprep.subr.mxu0 0.0
    %263 = vmatpush1.msra.mxu0 0.0
    %264 = vmatprep.subr.mxu0 0.0
    %265 = vmatpush1.msra.mxu0 0.0
    %266 = vmatprep.subr.mxu0 0.0
    %267 = vmatpush1.msra.mxu0 0.0
    %268 = vmatprep.subr.mxu0 0.0
    %269 = vmatpush1.msra.mxu0 0.0
    %270 = vmatprep.subr.mxu0 0.0
    %271 = vmatpush1.msra.mxu0 0.0
    %272 = vmatprep.subr.mxu0 0.0
    %273 = vmatpush1.msra.mxu0 0.0
    %274 = vmatprep.subr.mxu0 0.0
    %275 = vmatpush1.msra.mxu0 0.0
    %276 = vmatprep.subr.mxu0 0.0
    %277 = vmatpush1.msra.mxu0 0.0
    %278 = vmatprep.subr.mxu0 0.0
    %279 = vmatpush1.msra.mxu0 0.0
    %280 = vmatprep.subr.mxu0 0.0
    %281 = vmatpush1.msra.mxu0 0.0
    %282 = vmatprep.subr.mxu0 0.0
    %283 = vmatpush1.msra.mxu0 0.0
    %284 = vmatprep.subr.mxu0 0.0
    %285 = vmatpush1.msra.mxu0 0.0
    %286 = vmatprep.subr.mxu0 0.0
    %287 = vmatpush1.msra.mxu0 0.0
    %288 = vmatprep.subr.mxu0 0.0
    %289 = vmatpush1.msra.mxu0 0.0
    %290 = vmatprep.subr.mxu0 0.0
    %291 = vmatpush1.msra.mxu0 0.0
    %292 = vmatprep.subr.mxu0 0.0
    %293 = vmatpush1.msra.mxu0 0.0
    %294 = vmatprep.subr.mxu0 0.0
    %295 = vmatpush1.msra.mxu0 0.0
    %296 = vmatprep.subr.mxu0 0.0
    %297 = vmatpush1.msra.mxu0 0.0
    %298 = vmatprep.subr.mxu0 0.0
    %299 = vmatpush1.msra.mxu0 0.0
    %300 = vmatprep.subr.mxu0 0.0
    %301 = vmatpush1.msra.mxu0 0.0
    %302 = vmatprep.subr.mxu0 0.0
    %303 = vmatpush1.msra.mxu0 0.0
    %304 = vmatprep.subr.mxu0 0.0
    %305 = vmatpush1.msra.mxu0 0.0
    %306 = vmatprep.subr.mxu0 0.0
    %307 = vmatpush1.msra.mxu0 0.0
    %308 = vmatprep.subr.mxu0 0.0
    %309 = vmatpush1.msra.mxu0 0.0
    %310 = vmatprep.subr.mxu0 0.0
    %311 = vmatpush1.msra.mxu0 0.0
    %312 = vmatprep.subr.mxu0 0.0
    %313 = vmatpush1.msra.mxu0 0.0
    %314 = vmatprep.subr.mxu0 0.0
    %315 = vmatpush1.msra.mxu0 0.0
    %316 = vmatprep.subr.mxu0 0.0
    %317 = vmatpush1.msra.mxu0 0.0
    %318 = vmatprep.mubr.f32.mxu0 0.0
    %319 = vmatmul.mubr.f32.gmra.mrb[0].mxu0 %v118
    %v320 = vpop.f32.mrb[0].mxu0
    %v321 = vadd.f32 %v107, %v320
    %v322 = vpop.f32.mrb[0].mxu0
    %v323 = vadd.f32 %v111, %v322
    %324 = vmatprep.mubr.f32.mxu0 0.0
    %325 = vmatmul.mubr.f32.gmra.mrb[0].mxu0 %v121
    %v326 = vpop.f32.mrb[0].mxu0
    %v327 = vadd.f32 %v107, %v326
    %v328 = vpop.f32.mrb[0].mxu0
    %v329 = vadd.f32 %v111, %v328
    %330 = vmatprep.mubr.f32.mxu0 0.0
    %331 = vmatmul.mubr.f32.gmra.mrb[0].mxu0 %v124
    %v332 = vpop.f32.mrb[0].mxu0
    %v333 = vadd.f32 %v107, %v332
    %v334 = vpop.f32.mrb[0].mxu0
    %v335 = vadd.f32 %v111, %v334
    %336 = vmatprep.mubr.f32.mxu0 0.0
    %337 = vmatmul.mubr.f32.gmra.mrb[0].mxu0 %v127
    %v338 = vpop.f32.mrb[0].mxu0
    %v339 = vadd.f32 %v107, %v338
    %v340 = vpop.f32.mrb[0].mxu0
    %v341 = vadd.f32 %v111, %v340
    %342 = vmatprep.mubr.f32.mxu0 0.0
    %343 = vmatmul.mubr.f32.gmra.mrb[0].mxu0 %v130
    %v344 = vpop.f32.mrb[0].mxu0
    %v345 = vadd.f32 %v107, %v344
    %v346 = vpop.f32.mrb[0].mxu0
    %v347 = vadd.f32 %v111, %v346
    %348 = vmatprep.mubr.f32.mxu0 0.0
    %349 = vmatmul.mubr.f32.gmra.mrb[0].mxu0 %v133
    %v350 = vpop.f32.mrb[0].mxu0
    %v351 = vadd.f32 %v107, %v350
    %v352 = vpop.f32.mrb[0].mxu0
    %v353 = vadd.f32 %v111, %v352
    %354 = vmatprep.mubr.f32.mxu0 0.0
    %355 = vmatmul.mubr.f32.gmra.mrb[0].mxu0 %v136
    %v356 = vpop.f32.mrb[0].mxu0
    %v357 = vadd.f32 %v107, %v356
    %v358 = vpop.f32.mrb[0].mxu0
    %v359 = vadd.f32 %v111, %v358
    %360 = vmatprep.mubr.f32.mxu0 0.0
    %361 = vmatmul.mubr.f32.gmra.mrb[0].mxu0 %v139
    %v362 = vpop.f32.mrb[0].mxu0
    %v363 = vadd.f32 %v107, %v362
    %v364 = vpop.f32.mrb[0].mxu0
    %v365 = vadd.f32 %v111, %v364
    %366 = vdwg.mxu0
    %367 = vst [vmem:[#allocation2] sm:$0xff] %v208
    %368 = vst [vmem:[#allocation2 + $0x8] sm:$0xff] %v210
    %369 = vst [vmem:[#allocation2 + $0x10] sm:$0xff] %v321
    %370 = vst [vmem:[#allocation2 + $0x18] sm:$0xff] %v323
    %371 = vst [vmem:[#allocation2 + $0x20] sm:$0xff] %v214
    %372 = vst [vmem:[#allocation2 + $0x28] sm:$0xff] %v216
    %373 = vst [vmem:[#allocation2 + $0x30] sm:$0xff] %v327
    %374 = vst [vmem:[#allocation2 + $0x38] sm:$0xff] %v329
    %375 = vst [vmem:[#allocation2 + $0x40] sm:$0xff] %v220
    %376 = vst [vmem:[#allocation2 + $0x48] sm:$0xff] %v222
    %377 = vst [vmem:[#allocation2 + $0x50] sm:$0xff] %v333
    %378 = vst [vmem:[#allocation2 + $0x58] sm:$0xff] %v335
    %379 = vst [vmem:[#allocation2 + $0x60] sm:$0xff] %v226
    %380 = vst [vmem:[#allocation2 + $0x68] sm:$0xff] %v228
    %381 = vst [vmem:[#allocation2 + $0x70] sm:$0xff] %v339
    %382 = vst [vmem:[#allocation2 + $0x78] sm:$0xff] %v341
    %383 = vst [vmem:[#allocation2 + $0x80] sm:$0xff] %v232
    %384 = vst [vmem:[#allocation2 + $0x88] sm:$0xff] %v234
    %385 = vst [vmem:[#allocation2 + $0x90] sm:$0xff] %v345
    %386 = vst [vmem:[#allocation2 + $0x98] sm:$0xff] %v347
    %387 = vst [vmem:[#allocation2 + $0xa0] sm:$0xff] %v238
    %388 = vst [vmem:[#allocation2 + $0xa8] sm:$0xff] %v240
    %389 = vst [vmem:[#allocation2 + $0xb0] sm:$0xff] %v351
    %390 = vst [vmem:[#allocation2 + $0xb8] sm:$0xff] %v353
    %391 = vst [vmem:[#allocation2 + $0xc0] sm:$0xff] %v244
    %392 = vst [vmem:[#allocation2 + $0xc8] sm:$0xff] %v246
    %393 = vst [vmem:[#allocation2 + $0xd0] sm:$0xff] %v357
    %394 = vst [vmem:[#allocation2 + $0xd8] sm:$0xff] %v359
    %395 = vst [vmem:[#allocation2 + $0xe0] sm:$0xff] %v250
    %396 = vst [vmem:[#allocation2 + $0xe8] sm:$0xff] %v252
    %397 = vst [vmem:[#allocation2 + $0xf0] sm:$0xff] %v363
    %398 = vst [vmem:[#allocation2 + $0xf8] sm:$0xff] %v365
    %v399 = vld [vmem:[#allocation6] sm:$0xff]
    %v400 = vld [vmem:[#allocation6 + $0x8] sm:$0xff]
    %v401 = vld [vmem:[#allocation6 + $0x10] sm:$0xff]
    %v402 = vld [vmem:[#allocation6 + $0x18] sm:$0xff]
    %v403 = vld [vmem:[#allocation6 + $0x20] sm:$0xff]
    %v404 = vld [vmem:[#allocation6 + $0x28] sm:$0xff]
    %v405 = vld [vmem:[#allocation6 + $0x30] sm:$0xff]
    %v406 = vld [vmem:[#allocation6 + $0x38] sm:$0xff]
    %v407 = vld [vmem:[#allocation6 + $0x40] sm:$0xff]
    %v408 = vld [vmem:[#allocation6 + $0x48] sm:$0xff]
    %v409 = vld [vmem:[#allocation6 + $0x50] sm:$0xff]
    %v410 = vld [vmem:[#allocation6 + $0x58] sm:$0xff]
    %v411 = vld [vmem:[#allocation6 + $0x60] sm:$0xff]
    %v412 = vld [vmem:[#allocation6 + $0x68] sm:$0xff]
    %v413 = vld [vmem:[#allocation6 + $0x70] sm:$0xff]
    %v414 = vld [vmem:[#allocation6 + $0x78] sm:$0xff]
    %v415 = vld [vmem:[#allocation6 + $0x80] sm:$0xff]
    %v416 = vld [vmem:[#allocation6 + $0x88] sm:$0xff]
    %v417 = vld [vmem:[#allocation6 + $0x90] sm:$0xff]
    %v418 = vld [vmem:[#allocation6 + $0x98] sm:$0xff]
    %v419 = vld [vmem:[#allocation6 + $0xa0] sm:$0xff]
    %v420 = vld [vmem:[#allocation6 + $0xa8] sm:$0xff]
    %v421 = vld [vmem:[#allocation6 + $0xb0] sm:$0xff]
    %v422 = vld [vmem:[#allocation6 + $0xb8] sm:$0xff]
    %v423 = vld [vmem:[#allocation6 + $0xc0] sm:$0xff]
    %v424 = vld [vmem:[#allocation6 + $0xc8] sm:$0xff]
    %v425 = vld [vmem:[#allocation6 + $0xd0] sm:$0xff]
    %v426 = vld [vmem:[#allocation6 + $0xd8] sm:$0xff]
    %v427 = vld [vmem:[#allocation6 + $0xe0] sm:$0xff]
    %v428 = vld [vmem:[#allocation6 + $0xe8] sm:$0xff]
    %v429 = vld [vmem:[#allocation6 + $0xf0] sm:$0xff]
    %v430 = vld [vmem:[#allocation6 + $0xf8] sm:$0xff]
    %v431 = vld [vmem:[#allocation2] sm:$0xff]
    %v432 = vld [vmem:[#allocation2 + $0x8] sm:$0xff]
    %v433 = vld [vmem:[#allocation2 + $0x10] sm:$0xff]
    %v434 = vld [vmem:[#allocation2 + $0x18] sm:$0xff]
    %v467 = vunpack.c.l.b16 %v399
    %v468 = vunpack.c.h.b16 %v399
    %v469 = vunpack.c.l.b16 %v400
    %v470 = vunpack.c.h.b16 %v400
    %v471 = vunpack.c.l.b16 %v401
    %v472 = vunpack.c.h.b16 %v401
    %v473 = vunpack.c.l.b16 %v402
    %v474 = vunpack.c.h.b16 %v402
    %v475 = vunpack.c.l.b16 %v403
    %v476 = vunpack.c.h.b16 %v403
    %v477 = vunpack.c.l.b16 %v404
    %v478 = vunpack.c.h.b16 %v404
    %v479 = vunpack.c.l.b16 %v405
    %v480 = vunpack.c.h.b16 %v405
    %v481 = vunpack.c.l.b16 %v406
    %v482 = vunpack.c.h.b16 %v406
    %v483 = vunpack.c.l.b16 %v407
    %v484 = vunpack.c.h.b16 %v407
    %v485 = vunpack.c.l.b16 %v408
    %v486 = vunpack.c.h.b16 %v408
    %v487 = vunpack.c.l.b16 %v409
    %v488 = vunpack.c.h.b16 %v409
    %v489 = vunpack.c.l.b16 %v410
    %v490 = vunpack.c.h.b16 %v410
    %v491 = vunpack.c.l.b16 %v411
    %v492 = vunpack.c.h.b16 %v411
    %v493 = vunpack.c.l.b16 %v412
    %v494 = vunpack.c.h.b16 %v412
    %v495 = vunpack.c.l.b16 %v413
    %v496 = vunpack.c.h.b16 %v413
    %v497 = vunpack.c.l.b16 %v414
    %v498 = vunpack.c.h.b16 %v414
    %v499 = vunpack.c.l.b16 %v415
    %v500 = vunpack.c.h.b16 %v415
    %v501 = vunpack.c.l.b16 %v416
    %v502 = vunpack.c.h.b16 %v416
    %v503 = vunpack.c.l.b16 %v417
    %v504 = vunpack.c.h.b16 %v417
    %v505 = vunpack.c.l.b16 %v418
    %v506 = vunpack.c.h.b16 %v418
    %v507 = vunpack.c.l.b16 %v419
    %v508 = vunpack.c.h.b16 %v419
    %v509 = vunpack.c.l.b16 %v420
    %v510 = vunpack.c.h.b16 %v420
    %v511 = vunpack.c.l.b16 %v421
    %v512 = vunpack.c.h.b16 %v421
    %v513 = vunpack.c.l.b16 %v422
    %v514 = vunpack.c.h.b16 %v422
    %v515 = vunpack.c.l.b16 %v423
    %v516 = vunpack.c.h.b16 %v423
    %v517 = vunpack.c.l.b16 %v424
    %v518 = vunpack.c.h.b16 %v424
    %v519 = vunpack.c.l.b16 %v425
    %v520 = vunpack.c.h.b16 %v425
    %v521 = vunpack.c.l.b16 %v426
    %v522 = vunpack.c.h.b16 %v426
    %v523 = vunpack.c.l.b16 %v427
    %v524 = vunpack.c.h.b16 %v427
    %v525 = vunpack.c.l.b16 %v428
    %v526 = vunpack.c.h.b16 %v428
    %v527 = vunpack.c.l.b16 %v429
    %v528 = vunpack.c.h.b16 %v429
    %v529 = vunpack.c.l.b16 %v430
    %v530 = vunpack.c.h.b16 %v430
    %v531 = vpack.c.b16 %v471, %v467
    %v532 = vpack.c.b16 %v472, %v468
    %v533 = vpack.c.b16 %v473, %v469
    %v534 = vpack.c.b16 %v474, %v470
    %v535 = vpack.c.b16 %v479, %v475
    %v536 = vpack.c.b16 %v480, %v476
    %v537 = vpack.c.b16 %v481, %v477
    %v538 = vpack.c.b16 %v482, %v478
    %v539 = vpack.c.b16 %v487, %v483
    %v540 = vpack.c.b16 %v488, %v484
    %v541 = vpack.c.b16 %v489, %v485
    %v542 = vpack.c.b16 %v490, %v486
    %v543 = vpack.c.b16 %v495, %v491
    %v544 = vpack.c.b16 %v496, %v492
    %v545 = vpack.c.b16 %v497, %v493
    %v546 = vpack.c.b16 %v498, %v494
    %v547 = vpack.c.b16 %v503, %v499
    %v548 = vpack.c.b16 %v504, %v500
    %v549 = vpack.c.b16 %v505, %v501
    %v550 = vpack.c.b16 %v506, %v502
    %v551 = vpack.c.b16 %v511, %v507
    %v552 = vpack.c.b16 %v512, %v508
    %v553 = vpack.c.b16 %v513, %v509
    %v554 = vpack.c.b16 %v514, %v510
    %v555 = vpack.c.b16 %v519, %v515
    %v556 = vpack.c.b16 %v520, %v516
    %v557 = vpack.c.b16 %v521, %v517
    %v558 = vpack.c.b16 %v522, %v518
    %v559 = vpack.c.b16 %v527, %v523
    %v560 = vpack.c.b16 %v528, %v524
    %v561 = vpack.c.b16 %v529, %v525
    %v562 = vpack.c.b16 %v530, %v526
    %595 = vmatprep.subr.bf16.mxu0 %v532
    %596 = vmatpush1.bf16.msra.mxu0 %v531
    %597 = vmatprep.subr.bf16.mxu0 %v536
    %598 = vmatpush1.bf16.msra.mxu0 %v535
    %599 = vmatprep.subr.bf16.mxu0 %v540
    %600 = vmatpush1.bf16.msra.mxu0 %v539
    %601 = vmatprep.subr.bf16.mxu0 %v544
    %602 = vmatpush1.bf16.msra.mxu0 %v543
    %603 = vmatprep.subr.bf16.mxu0 %v548
    %604 = vmatpush1.bf16.msra.mxu0 %v547
    %605 = vmatprep.subr.bf16.mxu0 %v552
    %606 = vmatpush1.bf16.msra.mxu0 %v551
    %607 = vmatprep.subr.bf16.mxu0 %v556
    %608 = vmatpush1.bf16.msra.mxu0 %v555
    %609 = vmatprep.subr.bf16.mxu0 %v560
    %610 = vmatpush1.bf16.msra.mxu0 %v559
    %611 = vmatprep.subr.bf16.mxu0 0
    %612 = vmatpush1.bf16.msra.mxu0 0
    %613 = vmatprep.subr.bf16.mxu0 0
    %614 = vmatpush1.bf16.msra.mxu0 0
    %615 = vmatprep.subr.bf16.mxu0 0
    %616 = vmatpush1.bf16.msra.mxu0 0
    %617 = vmatprep.subr.bf16.mxu0 0
    %618 = vmatpush1.bf16.msra.mxu0 0
    %619 = vmatprep.subr.bf16.mxu0 0
    %620 = vmatpush1.bf16.msra.mxu0 0
    %621 = vmatprep.subr.bf16.mxu0 0
    %622 = vmatpush1.bf16.msra.mxu0 0
    %623 = vmatprep.subr.bf16.mxu0 0
    %624 = vmatpush1.bf16.msra.mxu0 0
    %625 = vmatprep.subr.bf16.mxu0 0
    %626 = vmatpush1.bf16.msra.mxu0 0
    %627 = vmatprep.mubr.bf16.mxu0 0
    %628 = vmatmul.mubr.bf16.gmra.mrb[0].mxu0 0
    %v629 = vpop.f32.mrb[0].mxu0
    %v630 = vadd.f32 0.0, %v629
    %v631 = vpop.f32.mrb[0].mxu0
    %v632 = vadd.f32 0.0, %v631
    %v633 = vpop.f32.mrb[0].mxu0
    %v634 = vpop.f32.mrb[0].mxu0
    %635 = vdwg.mxu0
    %636 = vmatprep.subr.bf16.mxu0 %v534
    %637 = vmatpush1.bf16.msra.mxu0 %v533
    %638 = vmatprep.subr.bf16.mxu0 %v538
    %639 = vmatpush1.bf16.msra.mxu0 %v537
    %640 = vmatprep.subr.bf16.mxu0 %v542
    %641 = vmatpush1.bf16.msra.mxu0 %v541
    %642 = vmatprep.subr.bf16.mxu0 %v546
    %643 = vmatpush1.bf16.msra.mxu0 %v545
    %644 = vmatprep.subr.bf16.mxu0 %v550
    %645 = vmatpush1.bf16.msra.mxu0 %v549
    %646 = vmatprep.subr.bf16.mxu0 %v554
    %647 = vmatpush1.bf16.msra.mxu0 %v553
    %648 = vmatprep.subr.bf16.mxu0 %v558
    %649 = vmatpush1.bf16.msra.mxu0 %v557
    %650 = vmatprep.subr.bf16.mxu0 %v562
    %651 = vmatpush1.bf16.msra.mxu0 %v561
    %652 = vmatprep.subr.bf16.mxu0 0
    %653 = vmatpush1.bf16.msra.mxu0 0
    %654 = vmatprep.subr.bf16.mxu0 0
    %655 = vmatpush1.bf16.msra.mxu0 0
    %656 = vmatprep.subr.bf16.mxu0 0
    %657 = vmatpush1.bf16.msra.mxu0 0
    %658 = vmatprep.subr.bf16.mxu0 0
    %659 = vmatpush1.bf16.msra.mxu0 0
    %660 = vmatprep.subr.bf16.mxu0 0
    %661 = vmatpush1.bf16.msra.mxu0 0
    %662 = vmatprep.subr.bf16.mxu0 0
    %663 = vmatpush1.bf16.msra.mxu0 0
    %664 = vmatprep.subr.bf16.mxu0 0
    %665 = vmatpush1.bf16.msra.mxu0 0
    %666 = vmatprep.subr.bf16.mxu0 0
    %667 = vmatpush1.bf16.msra.mxu0 0
    %668 = vmatprep.mubr.bf16.mxu0 0
    %669 = vmatmul.mubr.bf16.gmra.mrb[0].mxu0 0
    %v670 = vpop.f32.mrb[0].mxu0
    %v671 = vadd.f32 0.0, %v670
    %v672 = vpop.f32.mrb[0].mxu0
    %v673 = vadd.f32 0.0, %v672
    %v674 = vpop.f32.mrb[0].mxu0
    %v675 = vpop.f32.mrb[0].mxu0
    %676 = vdwg.mxu0
    %v677 = vadd.f32 %v431, %v630
    %v678 = vadd.f32 %v432, %v632
    %v679 = vadd.f32 %v433, %v671
    %v680 = vadd.f32 %v434, %v673
    %v681 = vxor.u32 %v677, 2147483648
    %v682 = vxor.u32 %v678, 2147483648
    %v683 = vxor.u32 %v679, 2147483648
    %v684 = vmul.f32 %v681, 1.442695
    %v685 = vpow.pop %v684
    %v686 = vmul.f32 %v682, 1.442695
    %v687 = vpow.pop %v686
    %v688 = vmul.f32 %v683, 1.442695
    %v689 = vpow.pop %v688
    %v690 = vadd.f32 %v685, 1.0
    %v691 = vadd.f32 %v687, 1.0
    %v692 = vadd.f32 %v689, 1.0
    %v693 = vrcp.pop %v690
    %v694 = vmul.f32 1.0, %v693
    %v695 = vrcp.pop %v691
    %v696 = vmul.f32 1.0, %v695
    %v697 = vrcp.pop %v692
    %v698 = vmul.f32 1.0, %v697
    %v699 = vtanh.pop %v680
    %v700 = vmul.f32 %v696, 0.0
    %v701 = vmul.f32 %v694, %v699
    %v702 = vadd.f32 %v700, %v701
    %v703 = vtanh.pop %v702
    %v704 = vmul.f32 %v698, %v703
    %v705 = vld [vmem:[#allocation2 + $0x20] sm:$0xff]
    %v706 = vld [vmem:[#allocation2 + $0x28] sm:$0xff]
    %v707 = vld [vmem:[#allocation2 + $0x30] sm:$0xff]
    %v708 = vld [vmem:[#allocation2 + $0x38] sm:$0xff]
    %v709 = vpack.c.bf16 %v704, %v704
    %710 = vmatprep.subr.bf16.mxu0 %v532
    %711 = vmatpush1.bf16.msra.mxu0 %v531
    %712 = vmatprep.subr.bf16.mxu0 %v536
    %713 = vmatpush1.bf16.msra.mxu0 %v535
    %714 = vmatprep.subr.bf16.mxu0 %v540
    %715 = vmatpush1.bf16.msra.mxu0 %v539
    %716 = vmatprep.subr.bf16.mxu0 %v544
    %717 = vmatpush1.bf16.msra.mxu0 %v543
    %718 = vmatprep.subr.bf16.mxu0 %v548
    %719 = vmatpush1.bf16.msra.mxu0 %v547
    %720 = vmatprep.subr.bf16.mxu0 %v552
    %721 = vmatpush1.bf16.msra.mxu0 %v551
    %722 = vmatprep.subr.bf16.mxu0 %v556
    %723 = vmatpush1.bf16.msra.mxu0 %v555
    %724 = vmatprep.subr.bf16.mxu0 %v560
    %725 = vmatpush1.bf16.msra.mxu0 %v559
    %726 = vmatprep.subr.bf16.mxu0 0
    %727 = vmatpush1.bf16.msra.mxu0 0
    %728 = vmatprep.subr.bf16.mxu0 0
    %729 = vmatpush1.bf16.msra.mxu0 0
    %730 = vmatprep.subr.bf16.mxu0 0
    %731 = vmatpush1.bf16.msra.mxu0 0
    %732 = vmatprep.subr.bf16.mxu0 0
    %733 = vmatpush1.bf16.msra.mxu0 0
    %734 = vmatprep.subr.bf16.mxu0 0
    %735 = vmatpush1.bf16.msra.mxu0 0
    %736 = vmatprep.subr.bf16.mxu0 0
    %737 = vmatpush1.bf16.msra.mxu0 0
    %738 = vmatprep.subr.bf16.mxu0 0
    %739 = vmatpush1.bf16.msra.mxu0 0
    %740 = vmatprep.subr.bf16.mxu0 0
    %741 = vmatpush1.bf16.msra.mxu0 0
    %742 = vmatprep.mubr.bf16.mxu0 0
    %743 = vmatmul.mubr.bf16.gmra.mrb[0].mxu0 %v709
    %v744 = vpop.f32.mrb[0].mxu0
    %v745 = vadd.f32 0.0, %v744
    %v746 = vpop.f32.mrb[0].mxu0
    %v747 = vadd.f32 0.0, %v746
    %v748 = vpop.f32.mrb[0].mxu0
    %v749 = vpop.f32.mrb[0].mxu0
    %750 = vdwg.mxu0
    %751 = vmatprep.subr.bf16.mxu0 %v534
    %752 = vmatpush1.bf16.msra.mxu0 %v533
    %753 = vmatprep.subr.bf16.mxu0 %v538
    %754 = vmatpush1.bf16.msra.mxu0 %v537
    %755 = vmatprep.subr.bf16.mxu0 %v542
    %756 = vmatpush1.bf16.msra.mxu0 %v541
    %757 = vmatprep.subr.bf16.mxu0 %v546
    %758 = vmatpush1.bf16.msra.mxu0 %v545
    %759 = vmatprep.subr.bf16.mxu0 %v550
    %760 = vmatpush1.bf16.msra.mxu0 %v549
    %761 = vmatprep.subr.bf16.mxu0 %v554
    %762 = vmatpush1.bf16.msra.mxu0 %v553
    %763 = vmatprep.subr.bf16.mxu0 %v558
    %764 = vmatpush1.bf16.msra.mxu0 %v557
    %765 = vmatprep.subr.bf16.mxu0 %v562
    %766 = vmatpush1.bf16.msra.mxu0 %v561
    %767 = vmatprep.subr.bf16.mxu0 0
    %768 = vmatpush1.bf16.msra.mxu0 0
    %769 = vmatprep.subr.bf16.mxu0 0
    %770 = vmatpush1.bf16.msra.mxu0 0
    %771 = vmatprep.subr.bf16.mxu0 0
    %772 = vmatpush1.bf16.msra.mxu0 0
    %773 = vmatprep.subr.bf16.mxu0 0
    %774 = vmatpush1.bf16.msra.mxu0 0
    %775 = vmatprep.subr.bf16.mxu0 0
    %776 = vmatpush1.bf16.msra.mxu0 0
    %777 = vmatprep.subr.bf16.mxu0 0
    %778 = vmatpush1.bf16.msra.mxu0 0
    %779 = vmatprep.subr.bf16.mxu0 0
    %780 = vmatpush1.bf16.msra.mxu0 0
    %781 = vmatprep.subr.bf16.mxu0 0
    %782 = vmatpush1.bf16.msra.mxu0 0
    %783 = vmatprep.mubr.bf16.mxu0 0
    %784 = vmatmul.mubr.bf16.gmra.mrb[0].mxu0 %v709
    %v785 = vpop.f32.mrb[0].mxu0
    %v786 = vadd.f32 0.0, %v785
    %v787 = vpop.f32.mrb[0].mxu0
    %v788 = vadd.f32 0.0, %v787
    %v789 = vpop.f32.mrb[0].mxu0
    %v790 = vpop.f32.mrb[0].mxu0
    %791 = vdwg.mxu0
    %v792 = vadd.f32 %v705, %v745
    %v793 = vadd.f32 %v706, %v747
    %v794 = vadd.f32 %v707, %v786
    %v795 = vadd.f32 %v708, %v788
    %v796 = vxor.u32 %v792, 2147483648
    %v797 = vxor.u32 %v793, 2147483648
    %v798 = vxor.u32 %v794, 2147483648
    %v799 = vmul.f32 %v796, 1.442695
    %v800 = vpow.pop %v799
    %v801 = vmul.f32 %v797, 1.442695
    %v802 = vpow.pop %v801
    %v803 = vmul.f32 %v798, 1.442695
    %v804 = vpow.pop %v803
    %v805 = vadd.f32 %v800, 1.0
    %v806 = vadd.f32 %v802, 1.0
    %v807 = vadd.f32 %v804, 1.0
    %v808 = vrcp.pop %v805
    %v809 = vmul.f32 1.0, %v808
    %v810 = vrcp.pop %v806
    %v811 = vmul.f32 1.0, %v810
    %v812 = vrcp.pop %v807
    %v813 = vmul.f32 1.0, %v812
    %v814 = vtanh.pop %v795
    %v815 = vmul.f32 %v811, %v702
    %v816 = vmul.f32 %v809, %v814
    %v817 = vadd.f32 %v815, %v816
    %v818 = vtanh.pop %v817
    %v819 = vmul.f32 %v813, %v818
    %v820 = vld [vmem:[#allocation2 + $0x40] sm:$0xff]
    %v821 = vld [vmem:[#allocation2 + $0x48] sm:$0xff]
    %v822 = vld [vmem:[#allocation2 + $0x50] sm:$0xff]
    %v823 = vld [vmem:[#allocation2 + $0x58] sm:$0xff]
    %v824 = vpack.c.bf16 %v819, %v819
    %825 = vmatprep.subr.bf16.mxu0 %v532
    %826 = vmatpush1.bf16.msra.mxu0 %v531
    %827 = vmatprep.subr.bf16.mxu0 %v536
    %828 = vmatpush1.bf16.msra.mxu0 %v535
    %829 = vmatprep.subr.bf16.mxu0 %v540
    %830 = vmatpush1.bf16.msra.mxu0 %v539
    %831 = vmatprep.subr.bf16.mxu0 %v544
    %832 = vmatpush1.bf16.msra.mxu0 %v543
    %833 = vmatprep.subr.bf16.mxu0 %v548
    %834 = vmatpush1.bf16.msra.mxu0 %v547
    %835 = vmatprep.subr.bf16.mxu0 %v552
    %836 = vmatpush1.bf16.msra.mxu0 %v551
    %837 = vmatprep.subr.bf16.mxu0 %v556
    %838 = vmatpush1.bf16.msra.mxu0 %v555
    %839 = vmatprep.subr.bf16.mxu0 %v560
    %840 = vmatpush1.bf16.msra.mxu0 %v559
    %841 = vmatprep.subr.bf16.mxu0 0
    %842 = vmatpush1.bf16.msra.mxu0 0
    %843 = vmatprep.subr.bf16.mxu0 0
    %844 = vmatpush1.bf16.msra.mxu0 0
    %845 = vmatprep.subr.bf16.mxu0 0
    %846 = vmatpush1.bf16.msra.mxu0 0
    %847 = vmatprep.subr.bf16.mxu0 0
    %848 = vmatpush1.bf16.msra.mxu0 0
    %849 = vmatprep.subr.bf16.mxu0 0
    %850 = vmatpush1.bf16.msra.mxu0 0
    %851 = vmatprep.subr.bf16.mxu0 0
    %852 = vmatpush1.bf16.msra.mxu0 0
    %853 = vmatprep.subr.bf16.mxu0 0
    %854 = vmatpush1.bf16.msra.mxu0 0
    %855 = vmatprep.subr.bf16.mxu0 0
    %856 = vmatpush1.bf16.msra.mxu0 0
    %857 = vmatprep.mubr.bf16.mxu0 0
    %858 = vmatmul.mubr.bf16.gmra.mrb[0].mxu0 %v824
    %v859 = vpop.f32.mrb[0].mxu0
    %v860 = vadd.f32 0.0, %v859
    %v861 = vpop.f32.mrb[0].mxu0
    %v862 = vadd.f32 0.0, %v861
    %v863 = vpop.f32.mrb[0].mxu0
    %v864 = vpop.f32.mrb[0].mxu0
    %865 = vdwg.mxu0
    %866 = vmatprep.subr.bf16.mxu0 %v534
    %867 = vmatpush1.bf16.msra.mxu0 %v533
    %868 = vmatprep.subr.bf16.mxu0 %v538
    %869 = vmatpush1.bf16.msra.mxu0 %v537
    %870 = vmatprep.subr.bf16.mxu0 %v542
    %871 = vmatpush1.bf16.msra.mxu0 %v541
    %872 = vmatprep.subr.bf16.mxu0 %v546
    %873 = vmatpush1.bf16.msra.mxu0 %v545
    %874 = vmatprep.subr.bf16.mxu0 %v550
    %875 = vmatpush1.bf16.msra.mxu0 %v549
    %876 = vmatprep.subr.bf16.mxu0 %v554
    %877 = vmatpush1.bf16.msra.mxu0 %v553
    %878 = vmatprep.subr.bf16.mxu0 %v558
    %879 = vmatpush1.bf16.msra.mxu0 %v557
    %880 = vmatprep.subr.bf16.mxu0 %v562
    %881 = vmatpush1.bf16.msra.mxu0 %v561
    %882 = vmatprep.subr.bf16.mxu0 0
    %883 = vmatpush1.bf16.msra.mxu0 0
    %884 = vmatprep.subr.bf16.mxu0 0
    %885 = vmatpush1.bf16.msra.mxu0 0
    %886 = vmatprep.subr.bf16.mxu0 0
    %887 = vmatpush1.bf16.msra.mxu0 0
    %888 = vmatprep.subr.bf16.mxu0 0
    %889 = vmatpush1.bf16.msra.mxu0 0
    %890 = vmatprep.subr.bf16.mxu0 0
    %891 = vmatpush1.bf16.msra.mxu0 0
    %892 = vmatprep.subr.bf16.mxu0 0
    %893 = vmatpush1.bf16.msra.mxu0 0
    %894 = vmatprep.subr.bf16.mxu0 0
    %895 = vmatpush1.bf16.msra.mxu0 0
    %896 = vmatprep.subr.bf16.mxu0 0
    %897 = vmatpush1.bf16.msra.mxu0 0
    %898 = vmatprep.mubr.bf16.mxu0 0
    %899 = vmatmul.mubr.bf16.gmra.mrb[0].mxu0 %v824
    %v900 = vpop.f32.mrb[0].mxu0
    %v901 = vadd.f32 0.0, %v900
    %v902 = vpop.f32.mrb[0].mxu0
    %v903 = vadd.f32 0.0, %v902
    %v904 = vpop.f32.mrb[0].mxu0
    %v905 = vpop.f32.mrb[0].mxu0
    %906 = vdwg.mxu0
    %v907 = vadd.f32 %v820, %v860
    %v908 = vadd.f32 %v821, %v862
    %v909 = vadd.f32 %v822, %v901
    %v910 = vadd.f32 %v823, %v903
    %v911 = vxor.u32 %v907, 2147483648
    %v912 = vxor.u32 %v908, 2147483648
    %v913 = vxor.u32 %v909, 2147483648
    %v914 = vmul.f32 %v911, 1.442695
    %v915 = vpow.pop %v914
    %v916 = vmul.f32 %v912, 1.442695
    %v917 = vpow.pop %v916
    %v918 = vmul.f32 %v913, 1.442695
    %v919 = vpow.pop %v918
    %v920 = vadd.f32 %v915, 1.0
    %v921 = vadd.f32 %v917, 1.0
    %v922 = vadd.f32 %v919, 1.0
    %v923 = vrcp.pop %v920
    %v924 = vmul.f32 1.0, %v923
    %v925 = vrcp.pop %v921
    %v926 = vmul.f32 1.0, %v925
    %v927 = vrcp.pop %v922
    %v928 = vmul.f32 1.0, %v927
    %v929 = vtanh.pop %v910
    %v930 = vmul.f32 %v926, %v817
    %v931 = vmul.f32 %v924, %v929
    %v932 = vadd.f32 %v930, %v931
    %v933 = vtanh.pop %v932
    %v934 = vmul.f32 %v928, %v933
    %v935 = vld [vmem:[#allocation2 + $0x60] sm:$0xff]
    %v936 = vld [vmem:[#allocation2 + $0x68] sm:$0xff]
    %v937 = vld [vmem:[#allocation2 + $0x70] sm:$0xff]
    %v938 = vld [vmem:[#allocation2 + $0x78] sm:$0xff]
    %v939 = vpack.c.bf16 %v934, %v934
    %940 = vmatprep.subr.bf16.mxu0 %v532
    %941 = vmatpush1.bf16.msra.mxu0 %v531
    %942 = vmatprep.subr.bf16.mxu0 %v536
    %943 = vmatpush1.bf16.msra.mxu0 %v535
    %944 = vmatprep.subr.bf16.mxu0 %v540
    %945 = vmatpush1.bf16.msra.mxu0 %v539
    %946 = vmatprep.subr.bf16.mxu0 %v544
    %947 = vmatpush1.bf16.msra.mxu0 %v543
    %948 = vmatprep.subr.bf16.mxu0 %v548
    %949 = vmatpush1.bf16.msra.mxu0 %v547
    %950 = vmatprep.subr.bf16.mxu0 %v552
    %951 = vmatpush1.bf16.msra.mxu0 %v551
    %952 = vmatprep.subr.bf16.mxu0 %v556
    %953 = vmatpush1.bf16.msra.mxu0 %v555
    %954 = vmatprep.subr.bf16.mxu0 %v560
    %955 = vmatpush1.bf16.msra.mxu0 %v559
    %956 = vmatprep.subr.bf16.mxu0 0
    %957 = vmatpush1.bf16.msra.mxu0 0
    %958 = vmatprep.subr.bf16.mxu0 0
    %959 = vmatpush1.bf16.msra.mxu0 0
    %960 = vmatprep.subr.bf16.mxu0 0
    %961 = vmatpush1.bf16.msra.mxu0 0
    %962 = vmatprep.subr.bf16.mxu0 0
    %963 = vmatpush1.bf16.msra.mxu0 0
    %964 = vmatprep.subr.bf16.mxu0 0
    %965 = vmatpush1.bf16.msra.mxu0 0
    %966 = vmatprep.subr.bf16.mxu0 0
    %967 = vmatpush1.bf16.msra.mxu0 0
    %968 = vmatprep.subr.bf16.mxu0 0
    %969 = vmatpush1.bf16.msra.mxu0 0
    %970 = vmatprep.subr.bf16.mxu0 0
    %971 = vmatpush1.bf16.msra.mxu0 0
    %972 = vmatprep.mubr.bf16.mxu0 0
    %973 = vmatmul.mubr.bf16.gmra.mrb[0].mxu0 %v939
    %v974 = vpop.f32.mrb[0].mxu0
    %v975 = vadd.f32 0.0, %v974
    %v976 = vpop.f32.mrb[0].mxu0
    %v977 = vadd.f32 0.0, %v976
    %v978 = vpop.f32.mrb[0].mxu0
    %v979 = vpop.f32.mrb[0].mxu0
    %980 = vdwg.mxu0
    %981 = vmatprep.subr.bf16.mxu0 %v534
    %982 = vmatpush1.bf16.msra.mxu0 %v533
    %983 = vmatprep.subr.bf16.mxu0 %v538
    %984 = vmatpush1.bf16.msra.mxu0 %v537
    %985 = vmatprep.subr.bf16.mxu0 %v542
    %986 = vmatpush1.bf16.msra.mxu0 %v541
    %987 = vmatprep.subr.bf16.mxu0 %v546
    %988 = vmatpush1.bf16.msra.mxu0 %v545
    %989 = vmatprep.subr.bf16.mxu0 %v550
    %990 = vmatpush1.bf16.msra.mxu0 %v549
    %991 = vmatprep.subr.bf16.mxu0 %v554
    %992 = vmatpush1.bf16.msra.mxu0 %v553
    %993 = vmatprep.subr.bf16.mxu0 %v558
    %994 = vmatpush1.bf16.msra.mxu0 %v557
    %995 = vmatprep.subr.bf16.mxu0 %v562
    %996 = vmatpush1.bf16.msra.mxu0 %v561
    %997 = vmatprep.subr.bf16.mxu0 0
    %998 = vmatpush1.bf16.msra.mxu0 0
    %999 = vmatprep.subr.bf16.mxu0 0
    %1000 = vmatpush1.bf16.msra.mxu0 0
    %1001 = vmatprep.subr.bf16.mxu0 0
    %1002 = vmatpush1.bf16.msra.mxu0 0
    %1003 = vmatprep.subr.bf16.mxu0 0
    %1004 = vmatpush1.bf16.msra.mxu0 0
    %1005 = vmatprep.subr.bf16.mxu0 0
    %1006 = vmatpush1.bf16.msra.mxu0 0
    %1007 = vmatprep.subr.bf16.mxu0 0
    %1008 = vmatpush1.bf16.msra.mxu0 0
    %1009 = vmatprep.subr.bf16.mxu0 0
    %1010 = vmatpush1.bf16.msra.mxu0 0
    %1011 = vmatprep.subr.bf16.mxu0 0
    %1012 = vmatpush1.bf16.msra.mxu0 0
    %1013 = vmatprep.mubr.bf16.mxu0 0
    %1014 = vmatmul.mubr.bf16.gmra.mrb[0].mxu0 %v939
    %v1015 = vpop.f32.mrb[0].mxu0
    %v1016 = vadd.f32 0.0, %v1015
    %v1017 = vpop.f32.mrb[0].mxu0
    %v1018 = vadd.f32 0.0, %v1017
    %v1019 = vpop.f32.mrb[0].mxu0
    %v1020 = vpop.f32.mrb[0].mxu0
    %1021 = vdwg.mxu0
    %v1022 = vadd.f32 %v935, %v975
    %v1023 = vadd.f32 %v936, %v977
    %v1024 = vadd.f32 %v937, %v1016
    %v1025 = vadd.f32 %v938, %v1018
    %v1026 = vxor.u32 %v1022, 2147483648
    %v1027 = vxor.u32 %v1023, 2147483648
    %v1028 = vxor.u32 %v1024, 2147483648
    %v1029 = vmul.f32 %v1026, 1.442695
    %v1030 = vpow.pop %v1029
    %v1031 = vmul.f32 %v1027, 1.442695
    %v1032 = vpow.pop %v1031
    %v1033 = vmul.f32 %v1028, 1.442695
    %v1034 = vpow.pop %v1033
    %v1035 = vadd.f32 %v1030, 1.0
    %v1036 = vadd.f32 %v1032, 1.0
    %v1037 = vadd.f32 %v1034, 1.0
    %v1038 = vrcp.pop %v1035
    %v1039 = vmul.f32 1.0, %v1038
    %v1040 = vrcp.pop %v1036
    %v1041 = vmul.f32 1.0, %v1040
    %v1042 = vrcp.pop %v1037
    %v1043 = vmul.f32 1.0, %v1042
    %v1044 = vtanh.pop %v1025
    %v1045 = vmul.f32 %v1041, %v932
    %v1046 = vmul.f32 %v1039, %v1044
    %v1047 = vadd.f32 %v1045, %v1046
    %v1048 = vtanh.pop %v1047
    %v1049 = vmul.f32 %v1043, %v1048
    %v1050 = vld [vmem:[#allocation2 + $0x80] sm:$0xff]
    %v1051 = vld [vmem:[#allocation2 + $0x88] sm:$0xff]
    %v1052 = vld [vmem:[#allocation2 + $0x90] sm:$0xff]
    %v1053 = vld [vmem:[#allocation2 + $0x98] sm:$0xff]
    %v1054 = vpack.c.bf16 %v1049, %v1049
    %1055 = vmatprep.subr.bf16.mxu0 %v532
    %1056 = vmatpush1.bf16.msra.mxu0 %v531
    %1057 = vmatprep.subr.bf16.mxu0 %v536
    %1058 = vmatpush1.bf16.msra.mxu0 %v535
    %1059 = vmatprep.subr.bf16.mxu0 %v540
    %1060 = vmatpush1.bf16.msra.mxu0 %v539
    %1061 = vmatprep.subr.bf16.mxu0 %v544
    %1062 = vmatpush1.bf16.msra.mxu0 %v543
    %1063 = vmatprep.subr.bf16.mxu0 %v548
    %1064 = vmatpush1.bf16.msra.mxu0 %v547
    %1065 = vmatprep.subr.bf16.mxu0 %v552
    %1066 = vmatpush1.bf16.msra.mxu0 %v551
    %1067 = vmatprep.subr.bf16.mxu0 %v556
    %1068 = vmatpush1.bf16.msra.mxu0 %v555
    %1069 = vmatprep.subr.bf16.mxu0 %v560
    %1070 = vmatpush1.bf16.msra.mxu0 %v559
    %1071 = vmatprep.subr.bf16.mxu0 0
    %1072 = vmatpush1.bf16.msra.mxu0 0
    %1073 = vmatprep.subr.bf16.mxu0 0
    %1074 = vmatpush1.bf16.msra.mxu0 0
    %1075 = vmatprep.subr.bf16.mxu0 0
    %1076 = vmatpush1.bf16.msra.mxu0 0
    %1077 = vmatprep.subr.bf16.mxu0 0
    %1078 = vmatpush1.bf16.msra.mxu0 0
    %1079 = vmatprep.subr.bf16.mxu0 0
    %1080 = vmatpush1.bf16.msra.mxu0 0
    %1081 = vmatprep.subr.bf16.mxu0 0
    %1082 = vmatpush1.bf16.msra.mxu0 0
    %1083 = vmatprep.subr.bf16.mxu0 0
    %1084 = vmatpush1.bf16.msra.mxu0 0
    %1085 = vmatprep.subr.bf16.mxu0 0
    %1086 = vmatpush1.bf16.msra.mxu0 0
    %1087 = vmatprep.mubr.bf16.mxu0 0
    %1088 = vmatmul.mubr.bf16.gmra.mrb[0].mxu0 %v1054
    %v1089 = vpop.f32.mrb[0].mxu0
    %v1090 = vadd.f32 0.0, %v1089
    %v1091 = vpop.f32.mrb[0].mxu0
    %v1092 = vadd.f32 0.0, %v1091
    %v1093 = vpop.f32.mrb[0].mxu0
    %v1094 = vpop.f32.mrb[0].mxu0
    %1095 = vdwg.mxu0
    %1096 = vmatprep.subr.bf16.mxu0 %v534
    %1097 = vmatpush1.bf16.msra.mxu0 %v533
    %1098 = vmatprep.subr.bf16.mxu0 %v538
    %1099 = vmatpush1.bf16.msra.mxu0 %v537
    %1100 = vmatprep.subr.bf16.mxu0 %v542
    %1101 = vmatpush1.bf16.msra.mxu0 %v541
    %1102 = vmatprep.subr.bf16.mxu0 %v546
    %1103 = vmatpush1.bf16.msra.mxu0 %v545
    %1104 = vmatprep.subr.bf16.mxu0 %v550
    %1105 = vmatpush1.bf16.msra.mxu0 %v549
    %1106 = vmatprep.subr.bf16.mxu0 %v554
    %1107 = vmatpush1.bf16.msra.mxu0 %v553
    %1108 = vmatprep.subr.bf16.mxu0 %v558
    %1109 = vmatpush1.bf16.msra.mxu0 %v557
    %1110 = vmatprep.subr.bf16.mxu0 %v562
    %1111 = vmatpush1.bf16.msra.mxu0 %v561
    %1112 = vmatprep.subr.bf16.mxu0 0
    %1113 = vmatpush1.bf16.msra.mxu0 0
    %1114 = vmatprep.subr.bf16.mxu0 0
    %1115 = vmatpush1.bf16.msra.mxu0 0
    %1116 = vmatprep.subr.bf16.mxu0 0
    %1117 = vmatpush1.bf16.msra.mxu0 0
    %1118 = vmatprep.subr.bf16.mxu0 0
    %1119 = vmatpush1.bf16.msra.mxu0 0
    %1120 = vmatprep.subr.bf16.mxu0 0
    %1121 = vmatpush1.bf16.msra.mxu0 0
    %1122 = vmatprep.subr.bf16.mxu0 0
    %1123 = vmatpush1.bf16.msra.mxu0 0
    %1124 = vmatprep.subr.bf16.mxu0 0
    %1125 = vmatpush1.bf16.msra.mxu0 0
    %1126 = vmatprep.subr.bf16.mxu0 0
    %1127 = vmatpush1.bf16.msra.mxu0 0
    %1128 = vmatprep.mubr.bf16.mxu0 0
    %1129 = vmatmul.mubr.bf16.gmra.mrb[0].mxu0 %v1054
    %v1130 = vpop.f32.mrb[0].mxu0
    %v1131 = vadd.f32 0.0, %v1130
    %v1132 = vpop.f32.mrb[0].mxu0
    %v1133 = vadd.f32 0.0, %v1132
    %v1134 = vpop.f32.mrb[0].mxu0
    %v1135 = vpop.f32.mrb[0].mxu0
    %1136 = vdwg.mxu0
    %v1137 = vadd.f32 %v1050, %v1090
    %v1138 = vadd.f32 %v1051, %v1092
    %v1139 = vadd.f32 %v1052, %v1131
    %v1140 = vadd.f32 %v1053, %v1133
    %v1141 = vxor.u32 %v1137, 2147483648
    %v1142 = vxor.u32 %v1138, 2147483648
    %v1143 = vxor.u32 %v1139, 2147483648
    %v1144 = vmul.f32 %v1141, 1.442695
    %v1145 = vpow.pop %v1144
    %v1146 = vmul.f32 %v1142, 1.442695
    %v1147 = vpow.pop %v1146
    %v1148 = vmul.f32 %v1143, 1.442695
    %v1149 = vpow.pop %v1148
    %v1150 = vadd.f32 %v1145, 1.0
    %v1151 = vadd.f32 %v1147, 1.0
    %v1152 = vadd.f32 %v1149, 1.0
    %v1153 = vrcp.pop %v1150
    %v1154 = vmul.f32 1.0, %v1153
    %v1155 = vrcp.pop %v1151
    %v1156 = vmul.f32 1.0, %v1155
    %v1157 = vrcp.pop %v1152
    %v1158 = vmul.f32 1.0, %v1157
    %v1159 = vtanh.pop %v1140
    %v1160 = vmul.f32 %v1156, %v1047
    %v1161 = vmul.f32 %v1154, %v1159
    %v1162 = vadd.f32 %v1160, %v1161
    %v1163 = vtanh.pop %v1162
    %v1164 = vmul.f32 %v1158, %v1163
    %v1165 = vld [vmem:[#allocation2 + $0xa0] sm:$0xff]
    %v1166 = vld [vmem:[#allocation2 + $0xa8] sm:$0xff]
    %v1167 = vld [vmem:[#allocation2 + $0xb0] sm:$0xff]
    %v1168 = vld [vmem:[#allocation2 + $0xb8] sm:$0xff]
    %v1169 = vpack.c.bf16 %v1164, %v1164
    %1170 = vmatprep.subr.bf16.mxu0 %v532
    %1171 = vmatpush1.bf16.msra.mxu0 %v531
    %1172 = vmatprep.subr.bf16.mxu0 %v536
    %1173 = vmatpush1.bf16.msra.mxu0 %v535
    %1174 = vmatprep.subr.bf16.mxu0 %v540
    %1175 = vmatpush1.bf16.msra.mxu0 %v539
    %1176 = vmatprep.subr.bf16.mxu0 %v544
    %1177 = vmatpush1.bf16.msra.mxu0 %v543
    %1178 = vmatprep.subr.bf16.mxu0 %v548
    %1179 = vmatpush1.bf16.msra.mxu0 %v547
    %1180 = vmatprep.subr.bf16.mxu0 %v552
    %1181 = vmatpush1.bf16.msra.mxu0 %v551
    %1182 = vmatprep.subr.bf16.mxu0 %v556
    %1183 = vmatpush1.bf16.msra.mxu0 %v555
    %1184 = vmatprep.subr.bf16.mxu0 %v560
    %1185 = vmatpush1.bf16.msra.mxu0 %v559
    %1186 = vmatprep.subr.bf16.mxu0 0
    %1187 = vmatpush1.bf16.msra.mxu0 0
    %1188 = vmatprep.subr.bf16.mxu0 0
    %1189 = vmatpush1.bf16.msra.mxu0 0
    %1190 = vmatprep.subr.bf16.mxu0 0
    %1191 = vmatpush1.bf16.msra.mxu0 0
    %1192 = vmatprep.subr.bf16.mxu0 0
    %1193 = vmatpush1.bf16.msra.mxu0 0
    %1194 = vmatprep.subr.bf16.mxu0 0
    %1195 = vmatpush1.bf16.msra.mxu0 0
    %1196 = vmatprep.subr.bf16.mxu0 0
    %1197 = vmatpush1.bf16.msra.mxu0 0
    %1198 = vmatprep.subr.bf16.mxu0 0
    %1199 = vmatpush1.bf16.msra.mxu0 0
    %1200 = vmatprep.subr.bf16.mxu0 0
    %1201 = vmatpush1.bf16.msra.mxu0 0
    %1202 = vmatprep.mubr.bf16.mxu0 0
    %1203 = vmatmul.mubr.bf16.gmra.mrb[0].mxu0 %v1169
    %v1204 = vpop.f32.mrb[0].mxu0
    %v1205 = vadd.f32 0.0, %v1204
    %v1206 = vpop.f32.mrb[0].mxu0
    %v1207 = vadd.f32 0.0, %v1206
    %v1208 = vpop.f32.mrb[0].mxu0
    %v1209 = vpop.f32.mrb[0].mxu0
    %1210 = vdwg.mxu0
    %1211 = vmatprep.subr.bf16.mxu0 %v534
    %1212 = vmatpush1.bf16.msra.mxu0 %v533
    %1213 = vmatprep.subr.bf16.mxu0 %v538
    %1214 = vmatpush1.bf16.msra.mxu0 %v537
    %1215 = vmatprep.subr.bf16.mxu0 %v542
    %1216 = vmatpush1.bf16.msra.mxu0 %v541
    %1217 = vmatprep.subr.bf16.mxu0 %v546
    %1218 = vmatpush1.bf16.msra.mxu0 %v545
    %1219 = vmatprep.subr.bf16.mxu0 %v550
    %1220 = vmatpush1.bf16.msra.mxu0 %v549
    %1221 = vmatprep.subr.bf16.mxu0 %v554
    %1222 = vmatpush1.bf16.msra.mxu0 %v553
    %1223 = vmatprep.subr.bf16.mxu0 %v558
    %1224 = vmatpush1.bf16.msra.mxu0 %v557
    %1225 = vmatprep.subr.bf16.mxu0 %v562
    %1226 = vmatpush1.bf16.msra.mxu0 %v561
    %1227 = vmatprep.subr.bf16.mxu0 0
    %1228 = vmatpush1.bf16.msra.mxu0 0
    %1229 = vmatprep.subr.bf16.mxu0 0
    %1230 = vmatpush1.bf16.msra.mxu0 0
    %1231 = vmatprep.subr.bf16.mxu0 0
    %1232 = vmatpush1.bf16.msra.mxu0 0
    %1233 = vmatprep.subr.bf16.mxu0 0
    %1234 = vmatpush1.bf16.msra.mxu0 0
    %1235 = vmatprep.subr.bf16.mxu0 0
    %1236 = vmatpush1.bf16.msra.mxu0 0
    %1237 = vmatprep.subr.bf16.mxu0 0
    %1238 = vmatpush1.bf16.msra.mxu0 0
    %1239 = vmatprep.subr.bf16.mxu0 0
    %1240 = vmatpush1.bf16.msra.mxu0 0
    %1241 = vmatprep.subr.bf16.mxu0 0
    %1242 = vmatpush1.bf16.msra.mxu0 0
    %1243 = vmatprep.mubr.bf16.mxu0 0
    %1244 = vmatmul.mubr.bf16.gmra.mrb[0].mxu0 %v1169
    %v1245 = vpop.f32.mrb[0].mxu0
    %v1246 = vadd.f32 0.0, %v1245
    %v1247 = vpop.f32.mrb[0].mxu0
    %v1248 = vadd.f32 0.0, %v1247
    %v1249 = vpop.f32.mrb[0].mxu0
    %v1250 = vpop.f32.mrb[0].mxu0
    %1251 = vdwg.mxu0
    %v1252 = vadd.f32 %v1165, %v1205
    %v1253 = vadd.f32 %v1166, %v1207
    %v1254 = vadd.f32 %v1167, %v1246
    %v1255 = vadd.f32 %v1168, %v1248
    %v1256 = vxor.u32 %v1252, 2147483648
    %v1257 = vxor.u32 %v1253, 2147483648
    %v1258 = vxor.u32 %v1254, 2147483648
    %v1259 = vmul.f32 %v1256, 1.442695
    %v1260 = vpow.pop %v1259
    %v1261 = vmul.f32 %v1257, 1.442695
    %v1262 = vpow.pop %v1261
    %v1263 = vmul.f32 %v1258, 1.442695
    %v1264 = vpow.pop %v1263
    %v1265 = vadd.f32 %v1260, 1.0
    %v1266 = vadd.f32 %v1262, 1.0
    %v1267 = vadd.f32 %v1264, 1.0
    %v1268 = vrcp.pop %v1265
    %v1269 = vmul.f32 1.0, %v1268
    %v1270 = vrcp.pop %v1266
    %v1271 = vmul.f32 1.0, %v1270
    %v1272 = vrcp.pop %v1267
    %v1273 = vmul.f32 1.0, %v1272
    %v1274 = vtanh.pop %v1255
    %v1275 = vmul.f32 %v1271, %v1162
    %v1276 = vmul.f32 %v1269, %v1274
    %v1277 = vadd.f32 %v1275, %v1276
    %v1278 = vtanh.pop %v1277
    %v1279 = vmul.f32 %v1273, %v1278
    %v1280 = vld [vmem:[#allocation2 + $0xc0] sm:$0xff]
    %v1281 = vld [vmem:[#allocation2 + $0xc8] sm:$0xff]
    %v1282 = vld [vmem:[#allocation2 + $0xd0] sm:$0xff]
    %v1283 = vld [vmem:[#allocation2 + $0xd8] sm:$0xff]
    %v1284 = vpack.c.bf16 %v1279, %v1279
    %1285 = vmatprep.subr.bf16.mxu0 %v532
    %1286 = vmatpush1.bf16.msra.mxu0 %v531
    %1287 = vmatprep.subr.bf16.mxu0 %v536
    %1288 = vmatpush1.bf16.msra.mxu0 %v535
    %1289 = vmatprep.subr.bf16.mxu0 %v540
    %1290 = vmatpush1.bf16.msra.mxu0 %v539
    %1291 = vmatprep.subr.bf16.mxu0 %v544
    %1292 = vmatpush1.bf16.msra.mxu0 %v543
    %1293 = vmatprep.subr.bf16.mxu0 %v548
    %1294 = vmatpush1.bf16.msra.mxu0 %v547
    %1295 = vmatprep.subr.bf16.mxu0 %v552
    %1296 = vmatpush1.bf16.msra.mxu0 %v551
    %1297 = vmatprep.subr.bf16.mxu0 %v556
    %1298 = vmatpush1.bf16.msra.mxu0 %v555
    %1299 = vmatprep.subr.bf16.mxu0 %v560
    %1300 = vmatpush1.bf16.msra.mxu0 %v559
    %1301 = vmatprep.subr.bf16.mxu0 0
    %1302 = vmatpush1.bf16.msra.mxu0 0
    %1303 = vmatprep.subr.bf16.mxu0 0
    %1304 = vmatpush1.bf16.msra.mxu0 0
    %1305 = vmatprep.subr.bf16.mxu0 0
    %1306 = vmatpush1.bf16.msra.mxu0 0
    %1307 = vmatprep.subr.bf16.mxu0 0
    %1308 = vmatpush1.bf16.msra.mxu0 0
    %1309 = vmatprep.subr.bf16.mxu0 0
    %1310 = vmatpush1.bf16.msra.mxu0 0
    %1311 = vmatprep.subr.bf16.mxu0 0
    %1312 = vmatpush1.bf16.msra.mxu0 0
    %1313 = vmatprep.subr.bf16.mxu0 0
    %1314 = vmatpush1.bf16.msra.mxu0 0
    %1315 = vmatprep.subr.bf16.mxu0 0
    %1316 = vmatpush1.bf16.msra.mxu0 0
    %1317 = vmatprep.mubr.bf16.mxu0 0
    %1318 = vmatmul.mubr.bf16.gmra.mrb[0].mxu0 %v1284
    %v1319 = vpop.f32.mrb[0].mxu0
    %v1320 = vadd.f32 0.0, %v1319
    %v1321 = vpop.f32.mrb[0].mxu0
    %v1322 = vadd.f32 0.0, %v1321
    %v1323 = vpop.f32.mrb[0].mxu0
    %v1324 = vpop.f32.mrb[0].mxu0
    %1325 = vdwg.mxu0
    %1326 = vmatprep.subr.bf16.mxu0 %v534
    %1327 = vmatpush1.bf16.msra.mxu0 %v533
    %1328 = vmatprep.subr.bf16.mxu0 %v538
    %1329 = vmatpush1.bf16.msra.mxu0 %v537
    %1330 = vmatprep.subr.bf16.mxu0 %v542
    %1331 = vmatpush1.bf16.msra.mxu0 %v541
    %1332 = vmatprep.subr.bf16.mxu0 %v546
    %1333 = vmatpush1.bf16.msra.mxu0 %v545
    %1334 = vmatprep.subr.bf16.mxu0 %v550
    %1335 = vmatpush1.bf16.msra.mxu0 %v549
    %1336 = vmatprep.subr.bf16.mxu0 %v554
    %1337 = vmatpush1.bf16.msra.mxu0 %v553
    %1338 = vmatprep.subr.bf16.mxu0 %v558
    %1339 = vmatpush1.bf16.msra.mxu0 %v557
    %1340 = vmatprep.subr.bf16.mxu0 %v562
    %1341 = vmatpush1.bf16.msra.mxu0 %v561
    %1342 = vmatprep.subr.bf16.mxu0 0
    %1343 = vmatpush1.bf16.msra.mxu0 0
    %1344 = vmatprep.subr.bf16.mxu0 0
    %1345 = vmatpush1.bf16.msra.mxu0 0
    %1346 = vmatprep.subr.bf16.mxu0 0
    %1347 = vmatpush1.bf16.msra.mxu0 0
    %1348 = vmatprep.subr.bf16.mxu0 0
    %1349 = vmatpush1.bf16.msra.mxu0 0
    %1350 = vmatprep.subr.bf16.mxu0 0
    %1351 = vmatpush1.bf16.msra.mxu0 0
    %1352 = vmatprep.subr.bf16.mxu0 0
    %1353 = vmatpush1.bf16.msra.mxu0 0
    %1354 = vmatprep.subr.bf16.mxu0 0
    %1355 = vmatpush1.bf16.msra.mxu0 0
    %1356 = vmatprep.subr.bf16.mxu0 0
    %1357 = vmatpush1.bf16.msra.mxu0 0
    %1358 = vmatprep.mubr.bf16.mxu0 0
    %1359 = vmatmul.mubr.bf16.gmra.mrb[0].mxu0 %v1284
    %v1360 = vpop.f32.mrb[0].mxu0
    %v1361 = vadd.f32 0.0, %v1360
    %v1362 = vpop.f32.mrb[0].mxu0
    %v1363 = vadd.f32 0.0, %v1362
    %v1364 = vpop.f32.mrb[0].mxu0
    %v1365 = vpop.f32.mrb[0].mxu0
    %1366 = vdwg.mxu0
    %v1367 = vadd.f32 %v1280, %v1320
    %v1368 = vadd.f32 %v1281, %v1322
    %v1369 = vadd.f32 %v1282, %v1361
    %v1370 = vadd.f32 %v1283, %v1363
    %v1371 = vxor.u32 %v1367, 2147483648
    %v1372 = vxor.u32 %v1368, 2147483648
    %v1373 = vxor.u32 %v1369, 2147483648
    %v1374 = vmul.f32 %v1371, 1.442695
    %v1375 = vpow.pop %v1374
    %v1376 = vmul.f32 %v1372, 1.442695
    %v1377 = vpow.pop %v1376
    %v1378 = vmul.f32 %v1373, 1.442695
    %v1379 = vpow.pop %v1378
    %v1380 = vadd.f32 %v1375, 1.0
    %v1381 = vadd.f32 %v1377, 1.0
    %v1382 = vadd.f32 %v1379, 1.0
    %v1383 = vrcp.pop %v1380
    %v1384 = vmul.f32 1.0, %v1383
    %v1385 = vrcp.pop %v1381
    %v1386 = vmul.f32 1.0, %v1385
    %v1387 = vrcp.pop %v1382
    %v1388 = vmul.f32 1.0, %v1387
    %v1389 = vtanh.pop %v1370
    %v1390 = vmul.f32 %v1386, %v1277
    %v1391 = vmul.f32 %v1384, %v1389
    %v1392 = vadd.f32 %v1390, %v1391
    %v1393 = vtanh.pop %v1392
    %v1394 = vmul.f32 %v1388, %v1393
    %v1395 = vld [vmem:[#allocation2 + $0xe0] sm:$0xff]
    %v1396 = vld [vmem:[#allocation2 + $0xe8] sm:$0xff]
    %v1397 = vld [vmem:[#allocation2 + $0xf0] sm:$0xff]
    %v1398 = vld [vmem:[#allocation2 + $0xf8] sm:$0xff]
    %v1399 = vpack.c.bf16 %v1394, %v1394
    %1400 = vmatprep.subr.bf16.mxu0 %v532
    %1401 = vmatpush1.bf16.msra.mxu0 %v531
    %1402 = vmatprep.subr.bf16.mxu0 %v536
    %1403 = vmatpush1.bf16.msra.mxu0 %v535
    %1404 = vmatprep.subr.bf16.mxu0 %v540
    %1405 = vmatpush1.bf16.msra.mxu0 %v539
    %1406 = vmatprep.subr.bf16.mxu0 %v544
    %1407 = vmatpush1.bf16.msra.mxu0 %v543
    %1408 = vmatprep.subr.bf16.mxu0 %v548
    %1409 = vmatpush1.bf16.msra.mxu0 %v547
    %1410 = vmatprep.subr.bf16.mxu0 %v552
    %1411 = vmatpush1.bf16.msra.mxu0 %v551
    %1412 = vmatprep.subr.bf16.mxu0 %v556
    %1413 = vmatpush1.bf16.msra.mxu0 %v555
    %1414 = vmatprep.subr.bf16.mxu0 %v560
    %1415 = vmatpush1.bf16.msra.mxu0 %v559
    %1416 = vmatprep.subr.bf16.mxu0 0
    %1417 = vmatpush1.bf16.msra.mxu0 0
    %1418 = vmatprep.subr.bf16.mxu0 0
    %1419 = vmatpush1.bf16.msra.mxu0 0
    %1420 = vmatprep.subr.bf16.mxu0 0
    %1421 = vmatpush1.bf16.msra.mxu0 0
    %1422 = vmatprep.subr.bf16.mxu0 0
    %1423 = vmatpush1.bf16.msra.mxu0 0
    %1424 = vmatprep.subr.bf16.mxu0 0
    %1425 = vmatpush1.bf16.msra.mxu0 0
    %1426 = vmatprep.subr.bf16.mxu0 0
    %1427 = vmatpush1.bf16.msra.mxu0 0
    %1428 = vmatprep.subr.bf16.mxu0 0
    %1429 = vmatpush1.bf16.msra.mxu0 0
    %1430 = vmatprep.subr.bf16.mxu0 0
    %1431 = vmatpush1.bf16.msra.mxu0 0
    %1432 = vmatprep.mubr.bf16.mxu0 0
    %1433 = vmatmul.mubr.bf16.gmra.mrb[0].mxu0 %v1399
    %v1434 = vpop.f32.mrb[0].mxu0
    %v1435 = vadd.f32 0.0, %v1434
    %v1436 = vpop.f32.mrb[0].mxu0
    %v1437 = vadd.f32 0.0, %v1436
    %v1438 = vpop.f32.mrb[0].mxu0
    %v1439 = vpop.f32.mrb[0].mxu0
    %1440 = vdwg.mxu0
    %1441 = vmatprep.subr.bf16.mxu0 %v534
    %1442 = vmatpush1.bf16.msra.mxu0 %v533
    %1443 = vmatprep.subr.bf16.mxu0 %v538
    %1444 = vmatpush1.bf16.msra.mxu0 %v537
    %1445 = vmatprep.subr.bf16.mxu0 %v542
    %1446 = vmatpush1.bf16.msra.mxu0 %v541
    %1447 = vmatprep.subr.bf16.mxu0 %v546
    %1448 = vmatpush1.bf16.msra.mxu0 %v545
    %1449 = vmatprep.subr.bf16.mxu0 %v550
    %1450 = vmatpush1.bf16.msra.mxu0 %v549
    %1451 = vmatprep.subr.bf16.mxu0 %v554
    %1452 = vmatpush1.bf16.msra.mxu0 %v553
    %1453 = vmatprep.subr.bf16.mxu0 %v558
    %1454 = vmatpush1.bf16.msra.mxu0 %v557
    %1455 = vmatprep.subr.bf16.mxu0 %v562
    %1456 = vmatpush1.bf16.msra.mxu0 %v561
    %1457 = vmatprep.subr.bf16.mxu0 0
    %1458 = vmatpush1.bf16.msra.mxu0 0
    %1459 = vmatprep.subr.bf16.mxu0 0
    %1460 = vmatpush1.bf16.msra.mxu0 0
    %1461 = vmatprep.subr.bf16.mxu0 0
    %1462 = vmatpush1.bf16.msra.mxu0 0
    %1463 = vmatprep.subr.bf16.mxu0 0
    %1464 = vmatpush1.bf16.msra.mxu0 0
    %1465 = vmatprep.subr.bf16.mxu0 0
    %1466 = vmatpush1.bf16.msra.mxu0 0
    %1467 = vmatprep.subr.bf16.mxu0 0
    %1468 = vmatpush1.bf16.msra.mxu0 0
    %1469 = vmatprep.subr.bf16.mxu0 0
    %1470 = vmatpush1.bf16.msra.mxu0 0
    %1471 = vmatprep.subr.bf16.mxu0 0
    %1472 = vmatpush1.bf16.msra.mxu0 0
    %1473 = vmatprep.mubr.bf16.mxu0 0
    %1474 = vmatmul.mubr.bf16.gmra.mrb[0].mxu0 %v1399
    %v1475 = vpop.f32.mrb[0].mxu0
    %v1476 = vadd.f32 0.0, %v1475
    %v1477 = vpop.f32.mrb[0].mxu0
    %v1478 = vadd.f32 0.0, %v1477
    %v1479 = vpop.f32.mrb[0].mxu0
    %v1480 = vpop.f32.mrb[0].mxu0
    %1481 = vdwg.mxu0
    %v1482 = vadd.f32 %v1395, %v1435
    %v1483 = vadd.f32 %v1396, %v1437
    %v1484 = vadd.f32 %v1397, %v1476
    %v1485 = vadd.f32 %v1398, %v1478
    %v1486 = vxor.u32 %v1482, 2147483648
    %v1487 = vxor.u32 %v1483, 2147483648
    %v1488 = vxor.u32 %v1484, 2147483648
    %v1489 = vmul.f32 %v1486, 1.442695
    %v1490 = vpow.pop %v1489
    %v1491 = vmul.f32 %v1487, 1.442695
    %v1492 = vpow.pop %v1491
    %v1493 = vmul.f32 %v1488, 1.442695
    %v1494 = vpow.pop %v1493
    %v1495 = vadd.f32 %v1490, 1.0
    %v1496 = vadd.f32 %v1492, 1.0
    %v1497 = vadd.f32 %v1494, 1.0
    %v1498 = vrcp.pop %v1495
    %v1499 = vmul.f32 1.0, %v1498
    %v1500 = vrcp.pop %v1496
    %v1501 = vmul.f32 1.0, %v1500
    %v1502 = vrcp.pop %v1497
    %v1503 = vmul.f32 1.0, %v1502
    %v1504 = vtanh.pop %v1485
    %v1505 = vmul.f32 %v1501, %v1392
    %v1506 = vmul.f32 %v1499, %v1504
    %v1507 = vadd.f32 %v1505, %v1506
    %v1508 = vtanh.pop %v1507
    %v1509 = vmul.f32 %v1503, %v1508
    %v1510 = vld [vmem:[%s4] sm:$0xff]
    %v1511 = vld [vmem:[%s4 + $0x8] sm:$0xff]
    %v1512 = vld [vmem:[%s4 + $0x10] sm:$0xff]
    %v1513 = vld [vmem:[%s4 + $0x18] sm:$0xff]
    %v1514 = vld [vmem:[%s4 + $0x20] sm:$0xff]
    %v1515 = vld [vmem:[%s4 + $0x28] sm:$0xff]
    %v1516 = vld [vmem:[%s4 + $0x30] sm:$0xff]
    %v1517 = vld [vmem:[%s4 + $0x38] sm:$0xff]
    %v1518 = vld [vmem:[%s4 + $0x40] sm:$0xff]
    %v1519 = vld [vmem:[%s4 + $0x48] sm:$0xff]
    %v1520 = vld [vmem:[%s4 + $0x50] sm:$0xff]
    %v1521 = vld [vmem:[%s4 + $0x58] sm:$0xff]
    %v1522 = vld [vmem:[%s4 + $0x60] sm:$0xff]
    %v1523 = vld [vmem:[%s4 + $0x68] sm:$0xff]
    %v1524 = vld [vmem:[%s4 + $0x70] sm:$0xff]
    %v1525 = vld [vmem:[%s4 + $0x78] sm:$0xff]
    %v1526 = vld [vmem:[%s5] sm:$0x1]
    %v1528 = vlaneseq
    %v1529 = vshrl.u32 %v1528, 7
    %v1530 = vsub.s32 0, %v1529
    %v1531 = vrot.slane %v1526, %v1530
    %1533 = vmatprep.subr.mxu0 0.0
    %1534 = vmatpush1.msra.mxu0 %v1510
    %1535 = vmatprep.subr.mxu0 0.0
    %1536 = vmatpush1.msra.mxu0 %v1511
    %1537 = vmatprep.subr.mxu0 0.0
    %1538 = vmatpush1.msra.mxu0 %v1512
    %1539 = vmatprep.subr.mxu0 0.0
    %1540 = vmatpush1.msra.mxu0 %v1513
    %1541 = vmatprep.subr.mxu0 0.0
    %1542 = vmatpush1.msra.mxu0 %v1514
    %1543 = vmatprep.subr.mxu0 0.0
    %1544 = vmatpush1.msra.mxu0 %v1515
    %1545 = vmatprep.subr.mxu0 0.0
    %1546 = vmatpush1.msra.mxu0 %v1516
    %1547 = vmatprep.subr.mxu0 0.0
    %1548 = vmatpush1.msra.mxu0 %v1517
    %1549 = vmatprep.subr.mxu0 0.0
    %1550 = vmatpush1.msra.mxu0 %v1518
    %1551 = vmatprep.subr.mxu0 0.0
    %1552 = vmatpush1.msra.mxu0 %v1519
    %1553 = vmatprep.subr.mxu0 0.0
    %1554 = vmatpush1.msra.mxu0 %v1520
    %1555 = vmatprep.subr.mxu0 0.0
    %1556 = vmatpush1.msra.mxu0 %v1521
    %1557 = vmatprep.subr.mxu0 0.0
    %1558 = vmatpush1.msra.mxu0 %v1522
    %1559 = vmatprep.subr.mxu0 0.0
    %1560 = vmatpush1.msra.mxu0 %v1523
    %1561 = vmatprep.subr.mxu0 0.0
    %1562 = vmatpush1.msra.mxu0 %v1524
    %1563 = vmatprep.subr.mxu0 0.0
    %1564 = vmatpush1.msra.mxu0 %v1525
    %1565 = vmatprep.subr.mxu0 0.0
    %1566 = vmatpush1.msra.mxu0 0.0
    %1567 = vmatprep.subr.mxu0 0.0
    %1568 = vmatpush1.msra.mxu0 0.0
    %1569 = vmatprep.subr.mxu0 0.0
    %1570 = vmatpush1.msra.mxu0 0.0
    %1571 = vmatprep.subr.mxu0 0.0
    %1572 = vmatpush1.msra.mxu0 0.0
    %1573 = vmatprep.subr.mxu0 0.0
    %1574 = vmatpush1.msra.mxu0 0.0
    %1575 = vmatprep.subr.mxu0 0.0
    %1576 = vmatpush1.msra.mxu0 0.0
    %1577 = vmatprep.subr.mxu0 0.0
    %1578 = vmatpush1.msra.mxu0 0.0
    %1579 = vmatprep.subr.mxu0 0.0
    %1580 = vmatpush1.msra.mxu0 0.0
    %1581 = vmatprep.subr.mxu0 0.0
    %1582 = vmatpush1.msra.mxu0 0.0
    %1583 = vmatprep.subr.mxu0 0.0
    %1584 = vmatpush1.msra.mxu0 0.0
    %1585 = vmatprep.subr.mxu0 0.0
    %1586 = vmatpush1.msra.mxu0 0.0
    %1587 = vmatprep.subr.mxu0 0.0
    %1588 = vmatpush1.msra.mxu0 0.0
    %1589 = vmatprep.subr.mxu0 0.0
    %1590 = vmatpush1.msra.mxu0 0.0
    %1591 = vmatprep.subr.mxu0 0.0
    %1592 = vmatpush1.msra.mxu0 0.0
    %1593 = vmatprep.subr.mxu0 0.0
    %1594 = vmatpush1.msra.mxu0 0.0
    %1595 = vmatprep.subr.mxu0 0.0
    %1596 = vmatpush1.msra.mxu0 0.0
    %1597 = vmatprep.mubr.f32.mxu0 0.0
    %1598 = vmatmul.mubr.f32.gmra.mrb[0].mxu0 %v1509
    %v1599 = vpop.f32.mrb[0].mxu0
    %v1600 = vadd.f32 %v1531, %v1599
    %v1601 = vpop.f32.mrb[0].mxu0
    %1602 = vdwg.mxu0
    %v1603 = vmax.f32 %v1600, 0.0
    %v1604 = vld [vmem:[%s6] sm:$0x1]
    %v1606 = vlaneseq
    %v1607 = vshrl.u32 %v1606, 7
    %v1608 = vsub.s32 0, %v1607
    %v1609 = vrot.slane %v1604, %v1608
    %v1611 = vmul.f32 %v1603, %v1609
    %1612 = vadd.xlane.f32.xlu0 %v1611
    %v1613 = vpop.xlane.xlu0 %1612
    %s1614 = sld [smem:[#allocation3]]
    %v1615 = vstv %s1614
    %v1616 = vadd.f32 %v1613, %v1615
    %1617 = vst [vmem:[%s8] sm:$0xff] %v1616
    // Predicated region
    $region46: #{meta_classifier_forward.1} parent=1 // pred_check
      _
    $region47: #{meta_classifier_forward.1} parent=1 // pred_check_branch
      %1619 = sbr.rel (0) target = $region49
    $region48: #{meta_classifier_forward.1} parent=1 // pred_region
      _
    $region49: #{meta_classifier_forward.1} parent=1 // pred_fallthru
      _
    // Predicated region
    $region50: #{meta_classifier_forward.1} parent=1 // pred_check
      _
    $region51: #{meta_classifier_forward.1} parent=1 // pred_check_branch
      %1621 = sbr.rel (0) target = $region53
    $region52: #{meta_classifier_forward.1} parent=1 // pred_region
      _
    $region53: #{meta_classifier_forward.1} parent=1 // pred_fallthru
      _
    %1622 = vsyncpa [#allocation5], 1
    %1623 = vsyncpa [#allocation7], 1

</llo_original>
